<compile_context>
chip_gen: v7x
topology: tpu7x:2x2x1
jax: 0.10.0
libtpu: 0.0.40
codegen_flags: <defaults>
</compile_context>

<pallas_src>
import functools

import jax
import jax.numpy as jnp
from jax import lax
from jax.experimental import pallas as pl
from jax.experimental.pallas import tpu as pltpu  # noqa: F401  (TPU backend)

S_DIM, O_DIM, A_DIM = 32, 16, 8
BATCH = 2
N_SAMPLES = 20  # q_s.rsample([20])


# ----------------------------- kernel helpers ------------------------------
def _softplus(x):
    # matches torch.nn.functional.softplus (beta=1, threshold=20)
    return jnp.where(x > 20.0, x, jnp.log1p(jnp.exp(jnp.minimum(x, 20.0))))


def _bcast_batch_rows(v, kb):
    """(B, S) -> (kb, S) where row i takes v[i % B] (k-major sample rows).

    Pure sublane-broadcast + select (no jnp.tile, no extra temps).
    """
    b_dim, s_dim = v.shape
    row_b = lax.broadcasted_iota(jnp.int32, (kb, s_dim), 0) % b_dim
    out = jnp.broadcast_to(v[0:1, :], (kb, s_dim))
    for b in range(1, b_dim):
        out = jnp.where(row_b == b,
                        jnp.broadcast_to(v[b:b + 1, :], (kb, s_dim)), out)
    return out


# --------------------------- fused APL kernel -------------------------------
def _apl_kernel(xs_ref, s_ref, eps_s_ref, eps_a_ref, wA_ref, wS_ref, b_ref,
                pq_out, big_out, *, s_dim, o_dim, a_dim):
    f32 = jnp.float32
    S, O, A = s_dim, o_dim, a_dim
    s_tm1 = s_ref[...]                    # (B, S)
    B = s_tm1.shape[0]
    KB = eps_s_ref.shape[0]               # K * B sample rows (k-major)

    dot = functools.partial(jnp.dot, preferred_element_type=f32)

    # ---- fused: GRU gates (r|z|n_x|n_h) + prior layer-1, one (B,56)x(56,160)
    g = dot(xs_ref[...], wA_ref[...]) + b_ref[0:1, :]
    r = jax.nn.sigmoid(g[:, 0:S])
    z = jax.nn.sigmoid(g[:, S:2 * S])
    n = jnp.tanh(g[:, 2 * S:3 * S] + r * g[:, 3 * S:4 * S])
    s_gru = (1.0 - z) * n + z * s_tm1                      # GRUCell output
    h = jnp.maximum(g[:, 4 * S:5 * S], 0.0)                # prior hidden 1

    # ---- prior hidden 2/3 and fused (mu|sigma) head
    h = jnp.maximum(dot(h, wS_ref[0])[:, :S] + b_ref[1:2, :S], 0.0)
    h = jnp.maximum(dot(h, wS_ref[1])[:, :S] + b_ref[2:3, :S], 0.0)
    ph = dot(h, wS_ref[2]) + b_ref[3:4, :2 * S]
    mu_ps = ph[:, :S]
    sig_ps = 1e-6 + _softplus(ph[:, S:2 * S])

    # ---- posterior head evaluated directly at K*B rows (broadcast, no tile)
    s_gru_b = _bcast_batch_rows(s_gru, KB)                 # (KB, S)
    qh = dot(s_gru_b, wS_ref[3]) + b_ref[4:5, :2 * S]      # (KB, 2S)
    mu_qs_b = qh[:, :S]
    sig_qs_b = 1e-6 + _softplus(qh[:, S:2 * S])

    # lane-dense (B, 4S) = (B, 128) slab: [mu_ps | sig_ps | mu_qs | sig_qs]
    pq_out[...] = jnp.concatenate(
        [mu_ps, sig_ps, mu_qs_b[:B], sig_qs_b[:B]], axis=-1)

    # ---- rsample([K])
    s_t = mu_qs_b + sig_qs_b * eps_s_ref[...]              # (KB, S)

    # ---- likelihood hidden-1 + control hidden share the s_t LHS
    bc = dot(s_t, wS_ref[4]) + b_ref[5:6, :2 * S]          # (KB, 64)
    hl = jnp.maximum(bc[:, :S], 0.0)
    ch = jnp.tanh(bc[:, S:2 * S])

    hl = jnp.maximum(dot(hl, wS_ref[5])[:, :S] + b_ref[6:7, :S], 0.0)

    # ---- likelihood heads (mu_o | sigma_o | mu_a) in one matmul
    lik = dot(hl, wS_ref[6]) + b_ref[7:8, :64]             # (KB, 64), cols 0:40 valid
    mu_o = lik[:, 0:O]
    sig_o = 1e-6 + _softplus(lik[:, O:2 * O])
    mu_a = lik[:, 2 * O:2 * O + A]
    # NOTE: mirrors the torch source, which reuses hidden_to_mu_a for sigma_a.
    sig_a = 1e-6 + _softplus(mu_a)

    # ---- control heads (mu_a | sigma_a) in one matmul, then rsample
    ctl = dot(ch, wS_ref[7]) + b_ref[8:9, :64]             # (KB, 64), cols 0:16 valid
    a_tp1 = ctl[:, 0:A] + (1e-6 + _softplus(ctl[:, A:2 * A])) * eps_a_ref[...]

    # single lane-dense (KB, 128) slab: [s_t|mu_o|sig_o|mu_a|sig_a|a_tp1|pad]
    pad = jnp.zeros((KB, big_out.shape[1] - (S + 2 * O + 3 * A)), f32)
    big_out[...] = jnp.concatenate(
        [s_t, mu_o, sig_o, mu_a, sig_a, a_tp1, pad], axis=-1)


# ------------------------------ parameters ----------------------------------
def _init_linear(key, fan_in, fan_out):
    kw, kb = jax.random.split(key)
    bound = 1.0 / float(fan_in) ** 0.5
    w = jax.random.uniform(kw, (fan_in, fan_out), jnp.float32, -bound, bound)
    b = jax.random.uniform(kb, (1, fan_out), jnp.float32, -bound, bound)
    return w, b


def _init_gru_per_gate(key, input_dim, hidden):
    ks = jax.random.split(key, 12)
    bound = 1.0 / float(hidden) ** 0.5
    u = lambda k, shape: jax.random.uniform(k, shape, jnp.float32, -bound, bound)
    wir, wiz, win = (u(ks[i], (input_dim, hidden)) for i in range(3))
    whr, whz, whn = (u(ks[3 + i], (hidden, hidden)) for i in range(3))
    bir, biz, bin_ = (u(ks[6 + i], (1, hidden)) for i in range(3))
    bhr, bhz, bhn = (u(ks[9 + i], (1, hidden)) for i in range(3))
    return [wir, wiz, win, whr, whz, whn, bir, biz, bin_, bhr, bhz, bhn]


def init_params(key, s_dim, o_dim, a_dim):
    ks = jax.random.split(key, 16)
    prior = []
    for i in range(3):
        prior += list(_init_linear(ks[i], s_dim, s_dim))
    prior += list(_init_linear(ks[3], s_dim, s_dim))    # hidden_to_mu_s
    prior += list(_init_linear(ks[4], s_dim, s_dim))    # hidden_to_sigma_s

    post = _init_gru_per_gate(ks[5], o_dim + a_dim, s_dim)
    post += list(_init_linear(ks[6], s_dim, s_dim))     # s_to_mu
    post += list(_init_linear(ks[7], s_dim, s_dim))     # s_to_sigma

    lik = []
    lik += list(_init_linear(ks[8], s_dim, s_dim))      # hidden 1
    lik += list(_init_linear(ks[9], s_dim, s_dim))      # hidden 2
    lik += list(_init_linear(ks[10], s_dim, o_dim))     # hidden_to_mu_o
    lik += list(_init_linear(ks[11], s_dim, o_dim))     # hidden_to_sigma_o
    lik += list(_init_linear(ks[12], s_dim, a_dim))     # hidden_to_mu_a

    ctrl = []
    ctrl += list(_init_linear(ks[13], s_dim, s_dim))    # s_to_hidden
    ctrl += list(_init_linear(ks[14], s_dim, a_dim))    # hidden_to_mu_a
    ctrl += list(_init_linear(ks[15], s_dim, a_dim))    # hidden_to_sigma_a

    return {"prior": prior, "posterior": post, "likelihood": lik, "control": ctrl}


def pack_params(params, s_dim=S_DIM, o_dim=O_DIM, a_dim=A_DIM):
    """One-time packing of all weights/biases into 3 DMA-friendly slabs."""
    S = s_dim
    pw1, pb1, pw2, pb2, pw3, pb3, pwmu, pbmu, pwsig, pbsig = params["prior"]
    (wir, wiz, win, whr, whz, whn, bir, biz, bin_, bhr, bhz, bhn,
     qwmu, qbmu, qwsig, qbsig) = params["posterior"]
    lw1, lb1, lw2, lb2, lwmo, lbmo, lwso, lbso, lwma, lbma = params["likelihood"]
    cwh, cbh, cwma, cbma, cwsa, cbsa = params["control"]

    IN = o_dim + a_dim
    zI = jnp.zeros((IN, S), jnp.float32)
    zS = jnp.zeros((S, S), jnp.float32)
    # wA: rows = [x(24) ; s_tm1(32)], cols = [r | z | n_x | n_h | prior_layer1]
    top = jnp.concatenate([wir, wiz, win, zI, zI], axis=1)   # (IN, 5S)
    bot = jnp.concatenate([whr, whz, zS, whn, pw1], axis=1)  # (S,  5S)
    wA = jnp.concatenate([top, bot], axis=0)                 # (56, 160)

    def pad64(w):
        return jnp.pad(w, ((0, 0), (0, 64 - w.shape[1])))

    wS = jnp.stack([
        pad64(pw2),                                          # 0
        pad64(pw3),                                          # 1
        jnp.concatenate([pwmu, pwsig], axis=1),              # 2 prior heads
        jnp.concatenate([qwmu, qwsig], axis=1),              # 3 posterior heads
        jnp.concatenate([lw1, cwh], axis=1),                 # 4 lik h1 | ctrl h
        pad64(lw2),                                          # 5
        pad64(jnp.concatenate([lwmo, lwso, lwma], axis=1)),  # 6 lik heads
        pad64(jnp.concatenate([cwma, cwsa], axis=1)),        # 7 ctrl heads
    ])                                                       # (8, 32, 64)

    bw = 5 * S  # 160

    def padrow(b):
        b = b.reshape(1, -1)
        return jnp.pad(b, ((0, 0), (0, bw - b.shape[1])))

    bias = jnp.concatenate([
        padrow(jnp.concatenate([bir + bhr, biz + bhz, bin_, bhn, pb1], axis=1)),
        padrow(pb2), padrow(pb3),
        padrow(jnp.concatenate([pbmu, pbsig], axis=1)),
        padrow(jnp.concatenate([qbmu, qbsig], axis=1)),
        padrow(jnp.concatenate([lb1, cbh], axis=1)),
        padrow(lb2),
        padrow(jnp.concatenate([lbmo, lbso, lbma], axis=1)),
        padrow(jnp.concatenate([cbma, cbsa], axis=1)),
    ], axis=0)                                               # (9, 160)

    return wA, wS, bias


# ------------------------------- forward ------------------------------------
@jax.jit
def apl_forward(packed, s_tm1, o_t, a_t, eps_s, eps_a):
    B, S = s_tm1.shape
    O = o_t.shape[1]
    A = a_t.shape[1]
    K = eps_s.shape[0]
    f32 = jnp.float32
    wA, wS, bias = packed

    # wrapper glue: concat inputs, flatten samples k-major
    xs = jnp.concatenate([o_t, a_t, s_tm1], axis=1)          # (B, O+A+S)
    eps_s_flat = eps_s.reshape(K * B, S)
    eps_a_flat = eps_a.reshape(K * B, A)

    kern = functools.partial(_apl_kernel, s_dim=S, o_dim=O, a_dim=A)
    pq, big = pl.pallas_call(
        kern,
        out_shape=(
            jax.ShapeDtypeStruct((B, 4 * S), f32),           # (2, 128)
            jax.ShapeDtypeStruct((K * B, 128), f32),         # (40, 128)
        ),
        cost_estimate=pl.CostEstimate(
            flops=900_000, transcendentals=7_000, bytes_accessed=136_000),
    )(xs, s_tm1, eps_s_flat, eps_a_flat, wA, wS, bias)

    # unpack the lane-dense slabs (free XLA slices/reshapes)
    mu_ps, sig_ps = pq[:, 0:S], pq[:, S:2 * S]
    mu_qs, sig_qs = pq[:, 2 * S:3 * S], pq[:, 3 * S:4 * S]
    s_t = big[:, 0:S].reshape(K, B, S)
    c = S
    mu_o = big[:, c:c + O].reshape(K, B, O); c += O
    sig_o = big[:, c:c + O].reshape(K, B, O); c += O
    mu_a = big[:, c:c + A].reshape(K, B, A); c += A
    sig_a = big[:, c:c + A].reshape(K, B, A); c += A
    a_tp1 = big[:, c:c + A].reshape(K, B, A)

    # distributions are returned as (mu, sigma) parameter pairs
    return s_t, a_tp1, (mu_qs, sig_qs), (mu_ps, sig_ps), (mu_o, sig_o), (mu_a, sig_a)


# -------------------------- pure-JAX reference ------------------------------
def _ref_forward(params, s_tm1, o_t, a_t, eps_s, eps_a):
    sp = lambda v: jnp.where(v > 20.0, v, jnp.log1p(jnp.exp(jnp.minimum(v, 20.0))))
    pw = params["prior"]
    h = s_tm1
    for i in range(3):
        h = jnp.maximum(h @ pw[2 * i] + pw[2 * i + 1], 0.0)
    mu_ps = h @ pw[6] + pw[7]
    sig_ps = 1e-6 + sp(h @ pw[8] + pw[9])

    (wir, wiz, win, whr, whz, whn, bir, biz, bin_, bhr, bhz, bhn,
     qwmu, qbmu, qwsig, qbsig) = params["posterior"]
    x = jnp.concatenate([o_t, a_t], 1)
    r = jax.nn.sigmoid(x @ wir + bir + s_tm1 @ whr + bhr)
    z = jax.nn.sigmoid(x @ wiz + biz + s_tm1 @ whz + bhz)
    n = jnp.tanh(x @ win + bin_ + r * (s_tm1 @ whn + bhn))
    st = (1.0 - z) * n + z * s_tm1
    mu_q = st @ qwmu + qbmu
    sig_q = 1e-6 + sp(st @ qwsig + qbsig)

    s_t = mu_q + sig_q * eps_s            # (K, B, S) via broadcast

    lw = params["likelihood"]
    h = jnp.maximum(s_t @ lw[0] + lw[1], 0.0)
    h = jnp.maximum(h @ lw[2] + lw[3], 0.0)
    mu_o = h @ lw[4] + lw[5]
    sig_o = 1e-6 + sp(h @ lw[6] + lw[7])
    mu_a = h @ lw[8] + lw[9]
    sig_a = 1e-6 + sp(mu_a)

    cw = params["control"]
    ch = jnp.tanh(s_t @ cw[0] + cw[1])
    cmu = ch @ cw[2] + cw[3]
    csig = 1e-6 + sp(ch @ cw[4] + cw[5])
    a_tp1 = cmu + csig * eps_a
    return s_t, a_tp1, (mu_q, sig_q), (mu_ps, sig_ps), (mu_o, sig_o), (mu_a, sig_a)


if __name__ == "__main__":
    key = jax.random.PRNGKey(0)
    kp, ks, ko, ka, kes, kea = jax.random.split(key, 6)
    params = init_params(kp, S_DIM, O_DIM, A_DIM)
    packed = pack_params(params)          # one-time weight/bias packing

    s_tm1 = jax.random.normal(ks, (BATCH, S_DIM), jnp.float32)
    o_t = jax.random.normal(ko, (BATCH, O_DIM), jnp.float32)
    a_t = jax.random.normal(ka, (BATCH, A_DIM), jnp.float32)
    # reparameterization noise generated outside the kernel for determinism
    eps_s = jax.random.normal(kes, (N_SAMPLES, BATCH, S_DIM), jnp.float32)
    eps_a = jax.random.normal(kea, (N_SAMPLES, BATCH, A_DIM), jnp.float32)

    out = apl_forward(packed, s_tm1, o_t, a_t, eps_s, eps_a)
    out = jax.block_until_ready(out)

    ref = _ref_forward(params, s_tm1, o_t, a_t, eps_s, eps_a)
    for got, want in zip(jax.tree_util.tree_leaves(out),
                         jax.tree_util.tree_leaves(ref)):
        assert got.shape == want.shape
        assert jnp.allclose(got, want, rtol=3e-5, atol=3e-5), "mismatch vs reference"

    print("KERNEL_OK")
</pallas_src>

<mosaic_0001>
module attributes {stable_mosaic.version = 11 : i64} {
  func.func @_apl_kernel(%arg0: memref<2x56xf32, #tpu.memory_space<vmem>>, %arg1: memref<2x32xf32, #tpu.memory_space<vmem>>, %arg2: memref<40x32xf32, #tpu.memory_space<vmem>>, %arg3: memref<40x8xf32, #tpu.memory_space<vmem>>, %arg4: memref<56x160xf32, #tpu.memory_space<vmem>>, %arg5: memref<8x32x64xf32, #tpu.memory_space<vmem>>, %arg6: memref<9x160xf32, #tpu.memory_space<vmem>>, %arg7: memref<2x128xf32, #tpu.memory_space<vmem>>, %arg8: memref<40x128xf32, #tpu.memory_space<vmem>>) attributes {dimension_semantics = [], scalar_prefetch = 0 : i64, scratch_operands = 0 : i64, tpu.core_type = #tpu.core_type<tc>} {
    %c0 = arith.constant 0 : index
    %c0_0 = arith.constant 0 : index
    %0 = vector.load %arg1[%c0, %c0_0] : memref<2x32xf32, #tpu.memory_space<vmem>>, vector<2x32xf32>
    %c0_1 = arith.constant 0 : index
    %c0_2 = arith.constant 0 : index
    %1 = vector.load %arg0[%c0_1, %c0_2] : memref<2x56xf32, #tpu.memory_space<vmem>>, vector<2x56xf32>
    %c0_3 = arith.constant 0 : index
    %c0_4 = arith.constant 0 : index
    %2 = vector.load %arg4[%c0_3, %c0_4] : memref<56x160xf32, #tpu.memory_space<vmem>>, vector<56x160xf32>
    %cst = arith.constant dense<0.000000e+00> : vector<2x160xf32>
    %3 = tpu.matmul %1, %2, %cst {dimension_numbers = #tpu.dot_dimension_numbers<[1], [0], [0], [1], [0, 0, 1, 1], [], []>} : vector<2x56xf32>, vector<56x160xf32>, vector<2x160xf32> -> vector<2x160xf32>
    %c0_5 = arith.constant 0 : index
    %c0_6 = arith.constant 0 : index
    %4 = vector.load %arg6[%c0_5, %c0_6] : memref<9x160xf32, #tpu.memory_space<vmem>>, vector<1x160xf32>
    %5 = vector.broadcast %4 : vector<1x160xf32> to vector<2x160xf32>
    %6 = arith.addf %3, %5 : vector<2x160xf32>
    %7 = vector.extract_strided_slice %6 {offsets = [0, 0], sizes = [2, 32], strides = [1, 1]} : vector<2x160xf32> to vector<2x32xf32>
    %8 = arith.negf %7 : vector<2x32xf32>
    %9 = math.exp %8 : vector<2x32xf32>
    %cst_7 = arith.constant 1.000000e+00 : f32
    %10 = vector.broadcast %cst_7 : f32 to vector<2x32xf32>
    %11 = arith.addf %10, %9 : vector<2x32xf32>
    %12 = arith.divf %10, %11 : vector<2x32xf32>
    %13 = vector.extract_strided_slice %6 {offsets = [0, 32], sizes = [2, 32], strides = [1, 1]} : vector<2x160xf32> to vector<2x32xf32>
    %14 = arith.negf %13 : vector<2x32xf32>
    %15 = math.exp %14 : vector<2x32xf32>
    %cst_8 = arith.constant 1.000000e+00 : f32
    %16 = vector.broadcast %cst_8 : f32 to vector<2x32xf32>
    %17 = arith.addf %16, %15 : vector<2x32xf32>
    %18 = arith.divf %16, %17 : vector<2x32xf32>
    %19 = vector.extract_strided_slice %6 {offsets = [0, 64], sizes = [2, 32], strides = [1, 1]} : vector<2x160xf32> to vector<2x32xf32>
    %20 = vector.extract_strided_slice %6 {offsets = [0, 96], sizes = [2, 32], strides = [1, 1]} : vector<2x160xf32> to vector<2x32xf32>
    %21 = arith.mulf %12, %20 : vector<2x32xf32>
    %22 = arith.addf %19, %21 : vector<2x32xf32>
    %23 = math.tanh %22 : vector<2x32xf32>
    %cst_9 = arith.constant 1.000000e+00 : f32
    %24 = vector.broadcast %cst_9 : f32 to vector<2x32xf32>
    %25 = arith.subf %24, %18 : vector<2x32xf32>
    %26 = arith.mulf %25, %23 : vector<2x32xf32>
    %27 = arith.mulf %18, %0 : vector<2x32xf32>
    %28 = arith.addf %26, %27 : vector<2x32xf32>
    %29 = vector.extract_strided_slice %6 {offsets = [0, 128], sizes = [2, 32], strides = [1, 1]} : vector<2x160xf32> to vector<2x32xf32>
    %cst_10 = arith.constant 0.000000e+00 : f32
    %30 = vector.broadcast %cst_10 : f32 to vector<2x32xf32>
    %31 = arith.maximumf %29, %30 : vector<2x32xf32>
    %c0_11 = arith.constant 0 : index
    %c0_12 = arith.constant 0 : index
    %c0_13 = arith.constant 0 : index
    %32 = vector.load %arg5[%c0_11, %c0_12, %c0_13] : memref<8x32x64xf32, #tpu.memory_space<vmem>>, vector<1x32x64xf32>
    %33 = vector.shape_cast %32 : vector<1x32x64xf32> to vector<32x64xf32>
    %cst_14 = arith.constant dense<0.000000e+00> : vector<2x64xf32>
    %34 = tpu.matmul %31, %33, %cst_14 {dimension_numbers = #tpu.dot_dimension_numbers<[1], [0], [0], [1], [0, 0, 1, 1], [], []>} : vector<2x32xf32>, vector<32x64xf32>, vector<2x64xf32> -> vector<2x64xf32>
    %35 = vector.extract_strided_slice %34 {offsets = [0, 0], sizes = [2, 32], strides = [1, 1]} : vector<2x64xf32> to vector<2x32xf32>
    %c1 = arith.constant 1 : index
    %c0_15 = arith.constant 0 : index
    %36 = vector.load %arg6[%c1, %c0_15] : memref<9x160xf32, #tpu.memory_space<vmem>>, vector<1x32xf32>
    %37 = vector.broadcast %36 : vector<1x32xf32> to vector<2x32xf32>
    %38 = arith.addf %35, %37 : vector<2x32xf32>
    %cst_16 = arith.constant 0.000000e+00 : f32
    %39 = vector.broadcast %cst_16 : f32 to vector<2x32xf32>
    %40 = arith.maximumf %38, %39 : vector<2x32xf32>
    %c1_17 = arith.constant 1 : index
    %c0_18 = arith.constant 0 : index
    %c0_19 = arith.constant 0 : index
    %41 = vector.load %arg5[%c1_17, %c0_18, %c0_19] : memref<8x32x64xf32, #tpu.memory_space<vmem>>, vector<1x32x64xf32>
    %42 = vector.shape_cast %41 : vector<1x32x64xf32> to vector<32x64xf32>
    %cst_20 = arith.constant dense<0.000000e+00> : vector<2x64xf32>
    %43 = tpu.matmul %40, %42, %cst_20 {dimension_numbers = #tpu.dot_dimension_numbers<[1], [0], [0], [1], [0, 0, 1, 1], [], []>} : vector<2x32xf32>, vector<32x64xf32>, vector<2x64xf32> -> vector<2x64xf32>
    %44 = vector.extract_strided_slice %43 {offsets = [0, 0], sizes = [2, 32], strides = [1, 1]} : vector<2x64xf32> to vector<2x32xf32>
    %c2 = arith.constant 2 : index
    %c0_21 = arith.constant 0 : index
    %45 = vector.load %arg6[%c2, %c0_21] : memref<9x160xf32, #tpu.memory_space<vmem>>, vector<1x32xf32>
    %46 = vector.broadcast %45 : vector<1x32xf32> to vector<2x32xf32>
    %47 = arith.addf %44, %46 : vector<2x32xf32>
    %cst_22 = arith.constant 0.000000e+00 : f32
    %48 = vector.broadcast %cst_22 : f32 to vector<2x32xf32>
    %49 = arith.maximumf %47, %48 : vector<2x32xf32>
    %c2_23 = arith.constant 2 : index
    %c0_24 = arith.constant 0 : index
    %c0_25 = arith.constant 0 : index
    %50 = vector.load %arg5[%c2_23, %c0_24, %c0_25] : memref<8x32x64xf32, #tpu.memory_space<vmem>>, vector<1x32x64xf32>
    %51 = vector.shape_cast %50 : vector<1x32x64xf32> to vector<32x64xf32>
    %cst_26 = arith.constant dense<0.000000e+00> : vector<2x64xf32>
    %52 = tpu.matmul %49, %51, %cst_26 {dimension_numbers = #tpu.dot_dimension_numbers<[1], [0], [0], [1], [0, 0, 1, 1], [], []>} : vector<2x32xf32>, vector<32x64xf32>, vector<2x64xf32> -> vector<2x64xf32>
    %c3 = arith.constant 3 : index
    %c0_27 = arith.constant 0 : index
    %53 = vector.load %arg6[%c3, %c0_27] : memref<9x160xf32, #tpu.memory_space<vmem>>, vector<1x64xf32>
    %54 = vector.broadcast %53 : vector<1x64xf32> to vector<2x64xf32>
    %55 = arith.addf %52, %54 : vector<2x64xf32>
    %56 = vector.extract_strided_slice %55 {offsets = [0, 0], sizes = [2, 32], strides = [1, 1]} : vector<2x64xf32> to vector<2x32xf32>
    %57 = vector.extract_strided_slice %55 {offsets = [0, 32], sizes = [2, 32], strides = [1, 1]} : vector<2x64xf32> to vector<2x32xf32>
    %cst_28 = arith.constant 2.000000e+01 : f32
    %58 = vector.broadcast %cst_28 : f32 to vector<2x32xf32>
    %59 = arith.cmpf ogt, %57, %58 : vector<2x32xf32>
    %cst_29 = arith.constant 2.000000e+01 : f32
    %60 = vector.broadcast %cst_29 : f32 to vector<2x32xf32>
    %61 = arith.minimumf %57, %60 : vector<2x32xf32>
    %62 = math.exp %61 : vector<2x32xf32>
    %63 = math.log1p %62 : vector<2x32xf32>
    %64 = arith.select %59, %57, %63 : vector<2x32xi1>, vector<2x32xf32>
    %cst_30 = arith.constant 9.99999997E-7 : f32
    %65 = vector.broadcast %cst_30 : f32 to vector<2x32xf32>
    %66 = arith.addf %65, %64 : vector<2x32xf32>
    %67 = tpu.iota {dimensions = array<i32: 0>} : vector<40x32xi32>
    %c2_i32 = arith.constant 2 : i32
    %c0_i32 = arith.constant 0 : i32
    %68 = arith.cmpi eq, %c2_i32, %c0_i32 : i32
    %c1_i32 = arith.constant 1 : i32
    %69 = arith.select %68, %c1_i32, %c2_i32 : i32
    %70 = vector.broadcast %69 : i32 to vector<40x32xi32>
    %71 = arith.remsi %67, %70 : vector<40x32xi32>
    %c0_i32_31 = arith.constant 0 : i32
    %72 = vector.broadcast %c0_i32_31 : i32 to vector<40x32xi32>
    %73 = arith.cmpi ne, %71, %72 : vector<40x32xi32>
    %c0_i32_32 = arith.constant 0 : i32
    %74 = vector.broadcast %c0_i32_32 : i32 to vector<40x32xi32>
    %75 = arith.cmpi slt, %71, %74 : vector<40x32xi32>
    %c0_i32_33 = arith.constant 0 : i32
    %76 = arith.cmpi slt, %69, %c0_i32_33 : i32
    %77 = vector.broadcast %76 : i1 to vector<40x32xi1>
    %78 = vector.broadcast %77 : vector<40x32xi1> to vector<40x32xi1>
    %79 = arith.xori %75, %78 : vector<40x32xi1>
    %80 = arith.andi %79, %73 : vector<40x32xi1>
    %81 = vector.broadcast %69 : i32 to vector<40x32xi32>
    %82 = arith.addi %71, %81 : vector<40x32xi32>
    %83 = arith.select %80, %82, %71 : vector<40x32xi1>, vector<40x32xi32>
    %84 = vector.extract_strided_slice %28 {offsets = [0, 0], sizes = [1, 32], strides = [1, 1]} : vector<2x32xf32> to vector<1x32xf32>
    %85 = vector.shape_cast %84 : vector<1x32xf32> to vector<1x32xf32>
    %86 = vector.broadcast %85 : vector<1x32xf32> to vector<40x32xf32>
    %c1_i32_34 = arith.constant 1 : i32
    %87 = vector.broadcast %c1_i32_34 : i32 to vector<40x32xi32>
    %88 = arith.cmpi eq, %83, %87 : vector<40x32xi32>
    %89 = vector.extract_strided_slice %28 {offsets = [1, 0], sizes = [1, 32], strides = [1, 1]} : vector<2x32xf32> to vector<1x32xf32>
    %90 = vector.shape_cast %89 : vector<1x32xf32> to vector<1x32xf32>
    %91 = vector.broadcast %90 : vector<1x32xf32> to vector<40x32xf32>
    %92 = arith.select %88, %91, %86 : vector<40x32xi1>, vector<40x32xf32>
    %c3_35 = arith.constant 3 : index
    %c0_36 = arith.constant 0 : index
    %c0_37 = arith.constant 0 : index
    %93 = vector.load %arg5[%c3_35, %c0_36, %c0_37] : memref<8x32x64xf32, #tpu.memory_space<vmem>>, vector<1x32x64xf32>
    %94 = vector.shape_cast %93 : vector<1x32x64xf32> to vector<32x64xf32>
    %cst_38 = arith.constant dense<0.000000e+00> : vector<40x64xf32>
    %95 = tpu.matmul %92, %94, %cst_38 {dimension_numbers = #tpu.dot_dimension_numbers<[1], [0], [0], [1], [0, 0, 1, 1], [], []>} : vector<40x32xf32>, vector<32x64xf32>, vector<40x64xf32> -> vector<40x64xf32>
    %c4 = arith.constant 4 : index
    %c0_39 = arith.constant 0 : index
    %96 = vector.load %arg6[%c4, %c0_39] : memref<9x160xf32, #tpu.memory_space<vmem>>, vector<1x64xf32>
    %97 = vector.broadcast %96 : vector<1x64xf32> to vector<40x64xf32>
    %98 = arith.addf %95, %97 : vector<40x64xf32>
    %99 = vector.extract_strided_slice %98 {offsets = [0, 0], sizes = [40, 32], strides = [1, 1]} : vector<40x64xf32> to vector<40x32xf32>
    %100 = vector.extract_strided_slice %98 {offsets = [0, 32], sizes = [40, 32], strides = [1, 1]} : vector<40x64xf32> to vector<40x32xf32>
    %cst_40 = arith.constant 2.000000e+01 : f32
    %101 = vector.broadcast %cst_40 : f32 to vector<40x32xf32>
    %102 = arith.cmpf ogt, %100, %101 : vector<40x32xf32>
    %cst_41 = arith.constant 2.000000e+01 : f32
    %103 = vector.broadcast %cst_41 : f32 to vector<40x32xf32>
    %104 = arith.minimumf %100, %103 : vector<40x32xf32>
    %105 = math.exp %104 : vector<40x32xf32>
    %106 = math.log1p %105 : vector<40x32xf32>
    %107 = arith.select %102, %100, %106 : vector<40x32xi1>, vector<40x32xf32>
    %cst_42 = arith.constant 9.99999997E-7 : f32
    %108 = vector.broadcast %cst_42 : f32 to vector<40x32xf32>
    %109 = arith.addf %108, %107 : vector<40x32xf32>
    %110 = vector.extract_strided_slice %99 {offsets = [0, 0], sizes = [2, 32], strides = [1, 1]} : vector<40x32xf32> to vector<2x32xf32>
    %111 = vector.extract_strided_slice %109 {offsets = [0, 0], sizes = [2, 32], strides = [1, 1]} : vector<40x32xf32> to vector<2x32xf32>
    %112 = tpu.concatenate %56, %66, %110, %111 in 1 : vector<2x32xf32>, vector<2x32xf32>, vector<2x32xf32>, vector<2x32xf32> -> vector<2x128xf32>
    %c0_43 = arith.constant 0 : index
    %c0_44 = arith.constant 0 : index
    %113 = vector.load %arg7[%c0_43, %c0_44] : memref<2x128xf32, #tpu.memory_space<vmem>>, vector<2x128xf32>
    tpu.vector_store %arg7[%c0_43, %c0_44], %112 {strides = array<i32>} : memref<2x128xf32, #tpu.memory_space<vmem>>, vector<2x128xf32>,
    %c0_45 = arith.constant 0 : index
    %c0_46 = arith.constant 0 : index
    %114 = vector.load %arg2[%c0_45, %c0_46] : memref<40x32xf32, #tpu.memory_space<vmem>>, vector<40x32xf32>
    %115 = arith.mulf %109, %114 : vector<40x32xf32>
    %116 = arith.addf %99, %115 : vector<40x32xf32>
    %c4_47 = arith.constant 4 : index
    %c0_48 = arith.constant 0 : index
    %c0_49 = arith.constant 0 : index
    %117 = vector.load %arg5[%c4_47, %c0_48, %c0_49] : memref<8x32x64xf32, #tpu.memory_space<vmem>>, vector<1x32x64xf32>
    %118 = vector.shape_cast %117 : vector<1x32x64xf32> to vector<32x64xf32>
    %cst_50 = arith.constant dense<0.000000e+00> : vector<40x64xf32>
    %119 = tpu.matmul %116, %118, %cst_50 {dimension_numbers = #tpu.dot_dimension_numbers<[1], [0], [0], [1], [0, 0, 1, 1], [], []>} : vector<40x32xf32>, vector<32x64xf32>, vector<40x64xf32> -> vector<40x64xf32>
    %c5 = arith.constant 5 : index
    %c0_51 = arith.constant 0 : index
    %120 = vector.load %arg6[%c5, %c0_51] : memref<9x160xf32, #tpu.memory_space<vmem>>, vector<1x64xf32>
    %121 = vector.broadcast %120 : vector<1x64xf32> to vector<40x64xf32>
    %122 = arith.addf %119, %121 : vector<40x64xf32>
    %123 = vector.extract_strided_slice %122 {offsets = [0, 0], sizes = [40, 32], strides = [1, 1]} : vector<40x64xf32> to vector<40x32xf32>
    %cst_52 = arith.constant 0.000000e+00 : f32
    %124 = vector.broadcast %cst_52 : f32 to vector<40x32xf32>
    %125 = arith.maximumf %123, %124 : vector<40x32xf32>
    %126 = vector.extract_strided_slice %122 {offsets = [0, 32], sizes = [40, 32], strides = [1, 1]} : vector<40x64xf32> to vector<40x32xf32>
    %127 = math.tanh %126 : vector<40x32xf32>
    %c5_53 = arith.constant 5 : index
    %c0_54 = arith.constant 0 : index
    %c0_55 = arith.constant 0 : index
    %128 = vector.load %arg5[%c5_53, %c0_54, %c0_55] : memref<8x32x64xf32, #tpu.memory_space<vmem>>, vector<1x32x64xf32>
    %129 = vector.shape_cast %128 : vector<1x32x64xf32> to vector<32x64xf32>
    %cst_56 = arith.constant dense<0.000000e+00> : vector<40x64xf32>
    %130 = tpu.matmul %125, %129, %cst_56 {dimension_numbers = #tpu.dot_dimension_numbers<[1], [0], [0], [1], [0, 0, 1, 1], [], []>} : vector<40x32xf32>, vector<32x64xf32>, vector<40x64xf32> -> vector<40x64xf32>
    %131 = vector.extract_strided_slice %130 {offsets = [0, 0], sizes = [40, 32], strides = [1, 1]} : vector<40x64xf32> to vector<40x32xf32>
    %c6 = arith.constant 6 : index
    %c0_57 = arith.constant 0 : index
    %132 = vector.load %arg6[%c6, %c0_57] : memref<9x160xf32, #tpu.memory_space<vmem>>, vector<1x32xf32>
    %133 = vector.broadcast %132 : vector<1x32xf32> to vector<40x32xf32>
    %134 = arith.addf %131, %133 : vector<40x32xf32>
    %cst_58 = arith.constant 0.000000e+00 : f32
    %135 = vector.broadcast %cst_58 : f32 to vector<40x32xf32>
    %136 = arith.maximumf %134, %135 : vector<40x32xf32>
    %c6_59 = arith.constant 6 : index
    %c0_60 = arith.constant 0 : index
    %c0_61 = arith.constant 0 : index
    %137 = vector.load %arg5[%c6_59, %c0_60, %c0_61] : memref<8x32x64xf32, #tpu.memory_space<vmem>>, vector<1x32x64xf32>
    %138 = vector.shape_cast %137 : vector<1x32x64xf32> to vector<32x64xf32>
    %cst_62 = arith.constant dense<0.000000e+00> : vector<40x64xf32>
    %139 = tpu.matmul %136, %138, %cst_62 {dimension_numbers = #tpu.dot_dimension_numbers<[1], [0], [0], [1], [0, 0, 1, 1], [], []>} : vector<40x32xf32>, vector<32x64xf32>, vector<40x64xf32> -> vector<40x64xf32>
    %c7 = arith.constant 7 : index
    %c0_63 = arith.constant 0 : index
    %140 = vector.load %arg6[%c7, %c0_63] : memref<9x160xf32, #tpu.memory_space<vmem>>, vector<1x64xf32>
    %141 = vector.broadcast %140 : vector<1x64xf32> to vector<40x64xf32>
    %142 = arith.addf %139, %141 : vector<40x64xf32>
    %143 = vector.extract_strided_slice %142 {offsets = [0, 0], sizes = [40, 16], strides = [1, 1]} : vector<40x64xf32> to vector<40x16xf32>
    %144 = vector.extract_strided_slice %142 {offsets = [0, 16], sizes = [40, 16], strides = [1, 1]} : vector<40x64xf32> to vector<40x16xf32>
    %cst_64 = arith.constant 2.000000e+01 : f32
    %145 = vector.broadcast %cst_64 : f32 to vector<40x16xf32>
    %146 = arith.cmpf ogt, %144, %145 : vector<40x16xf32>
    %cst_65 = arith.constant 2.000000e+01 : f32
    %147 = vector.broadcast %cst_65 : f32 to vector<40x16xf32>
    %148 = arith.minimumf %144, %147 : vector<40x16xf32>
    %149 = math.exp %148 : vector<40x16xf32>
    %150 = math.log1p %149 : vector<40x16xf32>
    %151 = arith.select %146, %144, %150 : vector<40x16xi1>, vector<40x16xf32>
    %cst_66 = arith.constant 9.99999997E-7 : f32
    %152 = vector.broadcast %cst_66 : f32 to vector<40x16xf32>
    %153 = arith.addf %152, %151 : vector<40x16xf32>
    %154 = vector.extract_strided_slice %142 {offsets = [0, 32], sizes = [40, 8], strides = [1, 1]} : vector<40x64xf32> to vector<40x8xf32>
    %cst_67 = arith.constant 2.000000e+01 : f32
    %155 = vector.broadcast %cst_67 : f32 to vector<40x8xf32>
    %156 = arith.cmpf ogt, %154, %155 : vector<40x8xf32>
    %cst_68 = arith.constant 2.000000e+01 : f32
    %157 = vector.broadcast %cst_68 : f32 to vector<40x8xf32>
    %158 = arith.minimumf %154, %157 : vector<40x8xf32>
    %159 = math.exp %158 : vector<40x8xf32>
    %160 = math.log1p %159 : vector<40x8xf32>
    %161 = arith.select %156, %154, %160 : vector<40x8xi1>, vector<40x8xf32>
    %cst_69 = arith.constant 9.99999997E-7 : f32
    %162 = vector.broadcast %cst_69 : f32 to vector<40x8xf32>
    %163 = arith.addf %162, %161 : vector<40x8xf32>
    %c7_70 = arith.constant 7 : index
    %c0_71 = arith.constant 0 : index
    %c0_72 = arith.constant 0 : index
    %164 = vector.load %arg5[%c7_70, %c0_71, %c0_72] : memref<8x32x64xf32, #tpu.memory_space<vmem>>, vector<1x32x64xf32>
    %165 = vector.shape_cast %164 : vector<1x32x64xf32> to vector<32x64xf32>
    %cst_73 = arith.constant dense<0.000000e+00> : vector<40x64xf32>
    %166 = tpu.matmul %127, %165, %cst_73 {dimension_numbers = #tpu.dot_dimension_numbers<[1], [0], [0], [1], [0, 0, 1, 1], [], []>} : vector<40x32xf32>, vector<32x64xf32>, vector<40x64xf32> -> vector<40x64xf32>
    %c8 = arith.constant 8 : index
    %c0_74 = arith.constant 0 : index
    %167 = vector.load %arg6[%c8, %c0_74] : memref<9x160xf32, #tpu.memory_space<vmem>>, vector<1x64xf32>
    %168 = vector.broadcast %167 : vector<1x64xf32> to vector<40x64xf32>
    %169 = arith.addf %166, %168 : vector<40x64xf32>
    %170 = vector.extract_strided_slice %169 {offsets = [0, 0], sizes = [40, 8], strides = [1, 1]} : vector<40x64xf32> to vector<40x8xf32>
    %171 = vector.extract_strided_slice %169 {offsets = [0, 8], sizes = [40, 8], strides = [1, 1]} : vector<40x64xf32> to vector<40x8xf32>
    %cst_75 = arith.constant 2.000000e+01 : f32
    %172 = vector.broadcast %cst_75 : f32 to vector<40x8xf32>
    %173 = arith.cmpf ogt, %171, %172 : vector<40x8xf32>
    %cst_76 = arith.constant 2.000000e+01 : f32
    %174 = vector.broadcast %cst_76 : f32 to vector<40x8xf32>
    %175 = arith.minimumf %171, %174 : vector<40x8xf32>
    %176 = math.exp %175 : vector<40x8xf32>
    %177 = math.log1p %176 : vector<40x8xf32>
    %178 = arith.select %173, %171, %177 : vector<40x8xi1>, vector<40x8xf32>
    %cst_77 = arith.constant 9.99999997E-7 : f32
    %179 = vector.broadcast %cst_77 : f32 to vector<40x8xf32>
    %180 = arith.addf %179, %178 : vector<40x8xf32>
    %c0_78 = arith.constant 0 : index
    %c0_79 = arith.constant 0 : index
    %181 = vector.load %arg3[%c0_78, %c0_79] : memref<40x8xf32, #tpu.memory_space<vmem>>, vector<40x8xf32>
    %182 = arith.mulf %180, %181 : vector<40x8xf32>
    %183 = arith.addf %170, %182 : vector<40x8xf32>
    %cst_80 = arith.constant 0.000000e+00 : f32
    %184 = vector.broadcast %cst_80 : f32 to vector<40x40xf32>
    %185 = tpu.concatenate %116, %143, %153, %154, %163, %183, %184 in 1 : vector<40x32xf32>, vector<40x16xf32>, vector<40x16xf32>, vector<40x8xf32>, vector<40x8xf32>, vector<40x8xf32>, vector<40x40xf32> -> vector<40x128xf32>
    %c0_81 = arith.constant 0 : index
    %c0_82 = arith.constant 0 : index
    %186 = vector.load %arg8[%c0_81, %c0_82] : memref<40x128xf32, #tpu.memory_space<vmem>>, vector<40x128xf32>
    tpu.vector_store %arg8[%c0_81, %c0_82], %185 {strides = array<i32>} : memref<40x128xf32, #tpu.memory_space<vmem>>, vector<40x128xf32>,
    return
  }
}

</mosaic_0001>

<llo_original>
// kernel: apl_forward.1
$region0: #{apl_forward.1}
  #allocation0 [shape = 'u32[]', space=smem, size = 0x4, offset = 0x4, fixed_abs, tag = 'smem constant byte address 0x4 - core index']
  #allocation1 [shape = 'u32[144,128]{1,0:T(1,128)}', space=vmem, size = 0x12000, scoped, tag = 'internal scratch']
  %s0 = inlined_call_operand.vmem [shape: f32[2,56], index: 0, kind: input, shape index: {}]
  %s1 = inlined_call_operand.vmem [shape: f32[2,32], index: 1, kind: input, shape index: {}]
  %s2 = inlined_call_operand.vmem [shape: f32[40,32], index: 2, kind: input, shape index: {}]
  %s3 = inlined_call_operand.vmem [shape: f32[40,8], index: 3, kind: input, shape index: {}]
  %s4 = inlined_call_operand.hbm [shape: f32[56,160], index: 4, kind: input, shape index: {}]
  %s5 = inlined_call_operand.hbm [shape: f32[8,32,64], index: 5, kind: input, shape index: {}]
  %s6 = inlined_call_operand.vmem [shape: f32[9,160], index: 6, kind: input, shape index: {}]
  %s7 = inlined_call_operand.vmem [shape: f32[2,128], index: 7, kind: output, shape index: {0}]
  %s8 = inlined_call_operand.vmem [shape: f32[40,128], index: 8, kind: output, shape index: {1}]
  %9 = xla_tuple %s7, %s8
  %s10 = sld [smem:[#allocation0]]
  $region54: #{apl_forward.1} parent=0
    _
  %s12 = ssub.s32 1, %s10
  %s13 = scalar_select 0, %s12, %s10
  $region1: #{apl_forward.1} parent=0
    #allocation2 [shape = 'u8[57344]{0}', space=vmem, size = 0xe000, scoped, tag = 'input window, operand 4, single buffered']
    #allocation3 [shape = 's32[1]{0}', space=sflag, size = 0x4, scoped, tag = 'scoped memory for apl_forward.1']
    #allocation4 [shape = 'u8[131072]{0}', space=vmem, size = 0x20000, scoped, tag = 'input window, operand 5, single buffered']
    #allocation5 [shape = 's32[1]{0}', space=sflag, size = 0x4, scoped, tag = 'scoped memory for apl_forward.1']
    %14 = vsyncpa [#allocation3], 0
    %15 = vsyncpa [#allocation5], 0
    // Predicated region
    $region2: #{apl_forward.1} parent=1 // pred_check
      _
    $region3: #{apl_forward.1} parent=1 // pred_check_branch
      %17 = sbr.rel (0) target = $region5
    $region4: #{apl_forward.1} parent=1 // pred_region
      _
    $region5: #{apl_forward.1} parent=1 // pred_fallthru
      _
    // Predicated region
    $region6: #{apl_forward.1} parent=1 // pred_check
      _
    $region7: #{apl_forward.1} parent=1 // pred_check_branch
      %19 = sbr.rel (0) target = $region9
    $region8: #{apl_forward.1} parent=1 // pred_region
      _
    $region9: #{apl_forward.1} parent=1 // pred_fallthru
      _
    // Predicated region
    $region10: #{apl_forward.1} parent=1 // pred_check
      _
    $region11: #{apl_forward.1} parent=1 // pred_check_branch
      %21 = sbr.rel (0) target = $region13
    $region12: #{apl_forward.1} parent=1 // pred_region
      _
    $region13: #{apl_forward.1} parent=1 // pred_fallthru
      _
    // Predicated region
    $region14: #{apl_forward.1} parent=1 // pred_check
      _
    $region15: #{apl_forward.1} parent=1 // pred_check_branch
      %23 = sbr.rel (0) target = $region17
    $region16: #{apl_forward.1} parent=1 // pred_region
      _
    $region17: #{apl_forward.1} parent=1 // pred_fallthru
      _
    // Predicated region
    $region18: #{apl_forward.1} parent=1 // pred_check
      _
    $region19: #{apl_forward.1} parent=1 // pred_check_branch
      %25 = sbr.rel (0) target = $region21
    $region20: #{apl_forward.1} parent=1 // pred_region
      %s27 = ssub.s32 1792, 1792
      %28 = vsyncadd [#allocation3], %s27
      %s29 = sshll.u32 [#allocation2], 4
      %s30 = int_to_ptr.vmem [resolvable:$true] %s29
      %35 = dma.hbm_to_vmem [thread:$0]  %s4, 1792, %s30, [#allocation3], 256, 256, 16
    $region21: #{apl_forward.1} parent=1 // pred_fallthru
      _
    // Predicated region
    $region22: #{apl_forward.1} parent=1 // pred_check
      _
    $region23: #{apl_forward.1} parent=1 // pred_check_branch
      %37 = sbr.rel (0) target = $region25
    $region24: #{apl_forward.1} parent=1 // pred_region
      %s39 = ssub.s32 4096, 4096
      %40 = vsyncadd [#allocation5], %s39
      %s41 = sshll.u32 [#allocation4], 4
      %s42 = int_to_ptr.vmem [resolvable:$true] %s41
      %47 = dma.hbm_to_vmem [thread:$0]  %s5, 4096, %s42, [#allocation5], 128, 128, 8
    $region25: #{apl_forward.1} parent=1 // pred_fallthru
      _
    // Predicated region
    $region26: #{apl_forward.1} parent=1 // pred_check
      _
    $region27: #{apl_forward.1} parent=1 // pred_check_branch
      %49 = sbr.rel (0) target = $region29
    $region28: #{apl_forward.1} parent=1 // pred_region
      _
    $region29: #{apl_forward.1} parent=1 // pred_fallthru
      _
    // Predicated region
    $region30: #{apl_forward.1} parent=1 // pred_check
      _
    $region31: #{apl_forward.1} parent=1 // pred_check_branch
      %51 = sbr.rel (0) target = $region33
    $region32: #{apl_forward.1} parent=1 // pred_region
      %52 = dma.done [#allocation3], 1792
    $region33: #{apl_forward.1} parent=1 // pred_fallthru
      _
    // Predicated region
    $region34: #{apl_forward.1} parent=1 // pred_check
      _
    $region35: #{apl_forward.1} parent=1 // pred_check_branch
      %54 = sbr.rel (0) target = $region37
    $region36: #{apl_forward.1} parent=1 // pred_region
      %55 = dma.done [#allocation5], 4096
    $region37: #{apl_forward.1} parent=1 // pred_fallthru
      _
    %v56 = vld [vmem:[%s1] sm:$0x3]
    %v57 = vld [vmem:[%s0] sm:$0x3]
    %v58 = vld [vmem:[#allocation2] sm:$0xff]
    %v59 = vld [vmem:[#allocation2 + $0x8] sm:$0xff]
    %v60 = vld [vmem:[#allocation2 + $0x10] sm:$0xff]
    %v61 = vld [vmem:[#allocation2 + $0x18] sm:$0xff]
    %v62 = vld [vmem:[#allocation2 + $0x20] sm:$0xff]
    %v63 = vld [vmem:[#allocation2 + $0x28] sm:$0xff]
    %v64 = vld [vmem:[#allocation2 + $0x30] sm:$0xff]
    %v65 = vld [vmem:[#allocation2 + $0x38] sm:$0xff]
    %v66 = vld [vmem:[#allocation2 + $0x40] sm:$0xff]
    %v67 = vld [vmem:[#allocation2 + $0x48] sm:$0xff]
    %v68 = vld [vmem:[#allocation2 + $0x50] sm:$0xff]
    %v69 = vld [vmem:[#allocation2 + $0x58] sm:$0xff]
    %v70 = vld [vmem:[#allocation2 + $0x60] sm:$0xff]
    %v71 = vld [vmem:[#allocation2 + $0x68] sm:$0xff]
    %v72 = vld [vmem:[%s6] ss:$8 sm:$0x3]
    %v74 = vlaneseq
    %v75 = vshrl.u32 %v74, 7
    %v76 = vsub.s32 0, %v75
    %v77 = vrot.slane %v72, %v76
    %v78 = vlaneseq
    %v79 = vshrl.u32 %v78, 7
    %v80 = vsub.s32 1, %v79
    %v81 = vrot.slane %v72, %v80
    %vm84 = vcmask 457728
    %v86 = vsel %vm84, %v57, 0
    %88 = vmatprep.subr.mxu0 %v59
    %89 = vmatpush1.msra.mxu0 %v58
    %90 = vmatprep.subr.mxu0 %v61
    %91 = vmatpush1.msra.mxu0 %v60
    %92 = vmatprep.subr.mxu0 %v63
    %93 = vmatpush1.msra.mxu0 %v62
    %94 = vmatprep.subr.mxu0 %v65
    %95 = vmatpush1.msra.mxu0 %v64
    %96 = vmatprep.subr.mxu0 %v67
    %97 = vmatpush1.msra.mxu0 %v66
    %98 = vmatprep.subr.mxu0 %v69
    %99 = vmatpush1.msra.mxu0 %v68
    %100 = vmatprep.subr.mxu0 %v71
    %101 = vmatpush1.msra.mxu0 %v70
    %102 = vmatprep.subr.mxu0 0.0
    %103 = vmatpush1.msra.mxu0 0.0
    %104 = vmatprep.subr.mxu0 0.0
    %105 = vmatpush1.msra.mxu0 0.0
    %106 = vmatprep.subr.mxu0 0.0
    %107 = vmatpush1.msra.mxu0 0.0
    %108 = vmatprep.subr.mxu0 0.0
    %109 = vmatpush1.msra.mxu0 0.0
    %110 = vmatprep.subr.mxu0 0.0
    %111 = vmatpush1.msra.mxu0 0.0
    %112 = vmatprep.subr.mxu0 0.0
    %113 = vmatpush1.msra.mxu0 0.0
    %114 = vmatprep.subr.mxu0 0.0
    %115 = vmatpush1.msra.mxu0 0.0
    %116 = vmatprep.subr.mxu0 0.0
    %117 = vmatpush1.msra.mxu0 0.0
    %118 = vmatprep.subr.mxu0 0.0
    %119 = vmatpush1.msra.mxu0 0.0
    %120 = vmatprep.subr.mxu0 0.0
    %121 = vmatpush1.msra.mxu0 0.0
    %122 = vmatprep.subr.mxu0 0.0
    %123 = vmatpush1.msra.mxu0 0.0
    %124 = vmatprep.subr.mxu0 0.0
    %125 = vmatpush1.msra.mxu0 0.0
    %126 = vmatprep.subr.mxu0 0.0
    %127 = vmatpush1.msra.mxu0 0.0
    %128 = vmatprep.subr.mxu0 0.0
    %129 = vmatpush1.msra.mxu0 0.0
    %130 = vmatprep.subr.mxu0 0.0
    %131 = vmatpush1.msra.mxu0 0.0
    %132 = vmatprep.subr.mxu0 0.0
    %133 = vmatpush1.msra.mxu0 0.0
    %134 = vmatprep.subr.mxu0 0.0
    %135 = vmatpush1.msra.mxu0 0.0
    %136 = vmatprep.subr.mxu0 0.0
    %137 = vmatpush1.msra.mxu0 0.0
    %138 = vmatprep.subr.mxu0 0.0
    %139 = vmatpush1.msra.mxu0 0.0
    %140 = vmatprep.subr.mxu0 0.0
    %141 = vmatpush1.msra.mxu0 0.0
    %142 = vmatprep.subr.mxu0 0.0
    %143 = vmatpush1.msra.mxu0 0.0
    %144 = vmatprep.subr.mxu0 0.0
    %145 = vmatpush1.msra.mxu0 0.0
    %146 = vmatprep.subr.mxu0 0.0
    %147 = vmatpush1.msra.mxu0 0.0
    %148 = vmatprep.subr.mxu0 0.0
    %149 = vmatpush1.msra.mxu0 0.0
    %150 = vmatprep.subr.mxu0 0.0
    %151 = vmatpush1.msra.mxu0 0.0
    %152 = vmatprep.mubr.f32.mxu0 0.0
    %153 = vmatmul.mubr.f32.gmra.mrb[0].mxu0 %v86
    %v154 = vpop.f32.mrb[0].mxu0
    %v155 = vadd.f32 %v77, %v154
    %v156 = vpop.f32.mrb[0].mxu0
    %v157 = vadd.f32 %v81, %v156
    %158 = vdwg.mxu0
    %v159 = vxor.u32 %v155, 2147483648
    %v160 = vmul.f32 %v159, 1.442695
    %v161 = vpow.pop %v160
    %v162 = vadd.f32 %v161, 1.0
    %v163 = vrcp.pop %v162
    %v164 = vmul.f32 1.0, %v163
    %166 = vrot.lane.b32.xlu0 %v155, 32
    %v167 = vpop.permute.xlu0 %166
    %v169 = vmul.f32 %v164, %v167
    %171 = vrot.lane.b32.xlu0 %v169, 64
    %v172 = vpop.permute.xlu0 %171
    %v174 = vadd.f32 %v155, %v172
    %v175 = vtanh.pop %v174
    %v176 = vsub.f32 1.0, %v164
    %178 = vrot.lane.b32.xlu0 %v175, 96
    %v179 = vpop.permute.xlu0 %178
    %v181 = vmul.f32 %v176, %v179
    %183 = vrot.lane.b32.xlu0 %v56, 32
    %v184 = vpop.permute.xlu0 %183
    %v186 = vmul.f32 %v164, %v184
    %v187 = vadd.f32 %v181, %v186
    %v188 = vmax.f32 %v157, 0.0
    %v189 = vld [vmem:[#allocation4] sm:$0xff]
    %v190 = vld [vmem:[#allocation4 + $0x8] sm:$0xff]
    %v191 = vld [vmem:[#allocation4 + $0x10] sm:$0xff]
    %v192 = vld [vmem:[#allocation4 + $0x18] sm:$0xff]
    %vm193 = vcmask 261120
    %v195 = vsel %vm193, %v188, 0
    %197 = vmatprep.subr.mxu0 0.0
    %198 = vmatpush1.msra.mxu0 %v189
    %199 = vmatprep.subr.mxu0 0.0
    %200 = vmatpush1.msra.mxu0 %v190
    %201 = vmatprep.subr.mxu0 0.0
    %202 = vmatpush1.msra.mxu0 %v191
    %203 = vmatprep.subr.mxu0 0.0
    %204 = vmatpush1.msra.mxu0 %v192
    %205 = vmatprep.subr.mxu0 0.0
    %206 = vmatpush1.msra.mxu0 0.0
    %207 = vmatprep.subr.mxu0 0.0
    %208 = vmatpush1.msra.mxu0 0.0
    %209 = vmatprep.subr.mxu0 0.0
    %210 = vmatpush1.msra.mxu0 0.0
    %211 = vmatprep.subr.mxu0 0.0
    %212 = vmatpush1.msra.mxu0 0.0
    %213 = vmatprep.subr.mxu0 0.0
    %214 = vmatpush1.msra.mxu0 0.0
    %215 = vmatprep.subr.mxu0 0.0
    %216 = vmatpush1.msra.mxu0 0.0
    %217 = vmatprep.subr.mxu0 0.0
    %218 = vmatpush1.msra.mxu0 0.0
    %219 = vmatprep.subr.mxu0 0.0
    %220 = vmatpush1.msra.mxu0 0.0
    %221 = vmatprep.subr.mxu0 0.0
    %222 = vmatpush1.msra.mxu0 0.0
    %223 = vmatprep.subr.mxu0 0.0
    %224 = vmatpush1.msra.mxu0 0.0
    %225 = vmatprep.subr.mxu0 0.0
    %226 = vmatpush1.msra.mxu0 0.0
    %227 = vmatprep.subr.mxu0 0.0
    %228 = vmatpush1.msra.mxu0 0.0
    %229 = vmatprep.subr.mxu0 0.0
    %230 = vmatpush1.msra.mxu0 0.0
    %231 = vmatprep.subr.mxu0 0.0
    %232 = vmatpush1.msra.mxu0 0.0
    %233 = vmatprep.subr.mxu0 0.0
    %234 = vmatpush1.msra.mxu0 0.0
    %235 = vmatprep.subr.mxu0 0.0
    %236 = vmatpush1.msra.mxu0 0.0
    %237 = vmatprep.subr.mxu0 0.0
    %238 = vmatpush1.msra.mxu0 0.0
    %239 = vmatprep.subr.mxu0 0.0
    %240 = vmatpush1.msra.mxu0 0.0
    %241 = vmatprep.subr.mxu0 0.0
    %242 = vmatpush1.msra.mxu0 0.0
    %243 = vmatprep.subr.mxu0 0.0
    %244 = vmatpush1.msra.mxu0 0.0
    %245 = vmatprep.subr.mxu0 0.0
    %246 = vmatpush1.msra.mxu0 0.0
    %247 = vmatprep.subr.mxu0 0.0
    %248 = vmatpush1.msra.mxu0 0.0
    %249 = vmatprep.subr.mxu0 0.0
    %250 = vmatpush1.msra.mxu0 0.0
    %251 = vmatprep.subr.mxu0 0.0
    %252 = vmatpush1.msra.mxu0 0.0
    %253 = vmatprep.subr.mxu0 0.0
    %254 = vmatpush1.msra.mxu0 0.0
    %255 = vmatprep.subr.mxu0 0.0
    %256 = vmatpush1.msra.mxu0 0.0
    %257 = vmatprep.subr.mxu0 0.0
    %258 = vmatpush1.msra.mxu0 0.0
    %259 = vmatprep.subr.mxu0 0.0
    %260 = vmatpush1.msra.mxu0 0.0
    %261 = vmatprep.mubr.f32.mxu0 0.0
    %262 = vmatmul.mubr.f32.gmra.mrb[0].mxu0 %v195
    %v263 = vpop.f32.mrb[0].mxu0
    %v264 = vadd.f32 0.0, %v263
    %v265 = vpop.f32.mrb[0].mxu0
    %266 = vdwg.mxu0
    %v267 = vld [vmem:[%s6 + $0x1] ss:$0 sm:$0xff]
    %v268 = vadd.f32 %v264, %v267
    %v269 = vmax.f32 %v268, 0.0
    %s270 = scalar_lea.vmem [#allocation4], 32
    %v271 = vld [vmem:[%s270] sm:$0xff]
    %v272 = vld [vmem:[%s270 + $0x8] sm:$0xff]
    %v273 = vld [vmem:[%s270 + $0x10] sm:$0xff]
    %v274 = vld [vmem:[%s270 + $0x18] sm:$0xff]
    %v276 = vsel %vm193, %v269, 0
    %278 = vmatprep.subr.mxu0 0.0
    %279 = vmatpush1.msra.mxu0 %v271
    %280 = vmatprep.subr.mxu0 0.0
    %281 = vmatpush1.msra.mxu0 %v272
    %282 = vmatprep.subr.mxu0 0.0
    %283 = vmatpush1.msra.mxu0 %v273
    %284 = vmatprep.subr.mxu0 0.0
    %285 = vmatpush1.msra.mxu0 %v274
    %286 = vmatprep.subr.mxu0 0.0
    %287 = vmatpush1.msra.mxu0 0.0
    %288 = vmatprep.subr.mxu0 0.0
    %289 = vmatpush1.msra.mxu0 0.0
    %290 = vmatprep.subr.mxu0 0.0
    %291 = vmatpush1.msra.mxu0 0.0
    %292 = vmatprep.subr.mxu0 0.0
    %293 = vmatpush1.msra.mxu0 0.0
    %294 = vmatprep.subr.mxu0 0.0
    %295 = vmatpush1.msra.mxu0 0.0
    %296 = vmatprep.subr.mxu0 0.0
    %297 = vmatpush1.msra.mxu0 0.0
    %298 = vmatprep.subr.mxu0 0.0
    %299 = vmatpush1.msra.mxu0 0.0
    %300 = vmatprep.subr.mxu0 0.0
    %301 = vmatpush1.msra.mxu0 0.0
    %302 = vmatprep.subr.mxu0 0.0
    %303 = vmatpush1.msra.mxu0 0.0
    %304 = vmatprep.subr.mxu0 0.0
    %305 = vmatpush1.msra.mxu0 0.0
    %306 = vmatprep.subr.mxu0 0.0
    %307 = vmatpush1.msra.mxu0 0.0
    %308 = vmatprep.subr.mxu0 0.0
    %309 = vmatpush1.msra.mxu0 0.0
    %310 = vmatprep.subr.mxu0 0.0
    %311 = vmatpush1.msra.mxu0 0.0
    %312 = vmatprep.subr.mxu0 0.0
    %313 = vmatpush1.msra.mxu0 0.0
    %314 = vmatprep.subr.mxu0 0.0
    %315 = vmatpush1.msra.mxu0 0.0
    %316 = vmatprep.subr.mxu0 0.0
    %317 = vmatpush1.msra.mxu0 0.0
    %318 = vmatprep.subr.mxu0 0.0
    %319 = vmatpush1.msra.mxu0 0.0
    %320 = vmatprep.subr.mxu0 0.0
    %321 = vmatpush1.msra.mxu0 0.0
    %322 = vmatprep.subr.mxu0 0.0
    %323 = vmatpush1.msra.mxu0 0.0
    %324 = vmatprep.subr.mxu0 0.0
    %325 = vmatpush1.msra.mxu0 0.0
    %326 = vmatprep.subr.mxu0 0.0
    %327 = vmatpush1.msra.mxu0 0.0
    %328 = vmatprep.subr.mxu0 0.0
    %329 = vmatpush1.msra.mxu0 0.0
    %330 = vmatprep.subr.mxu0 0.0
    %331 = vmatpush1.msra.mxu0 0.0
    %332 = vmatprep.subr.mxu0 0.0
    %333 = vmatpush1.msra.mxu0 0.0
    %334 = vmatprep.subr.mxu0 0.0
    %335 = vmatpush1.msra.mxu0 0.0
    %336 = vmatprep.subr.mxu0 0.0
    %337 = vmatpush1.msra.mxu0 0.0
    %338 = vmatprep.subr.mxu0 0.0
    %339 = vmatpush1.msra.mxu0 0.0
    %340 = vmatprep.subr.mxu0 0.0
    %341 = vmatpush1.msra.mxu0 0.0
    %342 = vmatprep.mubr.f32.mxu0 0.0
    %343 = vmatmul.mubr.f32.gmra.mrb[0].mxu0 %v276
    %v344 = vpop.f32.mrb[0].mxu0
    %v345 = vadd.f32 0.0, %v344
    %v346 = vpop.f32.mrb[0].mxu0
    %347 = vdwg.mxu0
    %v348 = vld [vmem:[%s6 + $0x2] ss:$0 sm:$0xff]
    %v349 = vadd.f32 %v345, %v348
    %v350 = vmax.f32 %v349, 0.0
    %s351 = scalar_lea.vmem [#allocation4], 64
    %v352 = vld [vmem:[%s351] sm:$0xff]
    %v353 = vld [vmem:[%s351 + $0x8] sm:$0xff]
    %v354 = vld [vmem:[%s351 + $0x10] sm:$0xff]
    %v355 = vld [vmem:[%s351 + $0x18] sm:$0xff]
    %v356 = vld [vmem:[%s6 + $0x3] ss:$0 sm:$0xff]
    %v358 = vsel %vm193, %v350, 0
    %360 = vmatprep.subr.mxu0 0.0
    %361 = vmatpush1.msra.mxu0 %v352
    %362 = vmatprep.subr.mxu0 0.0
    %363 = vmatpush1.msra.mxu0 %v353
    %364 = vmatprep.subr.mxu0 0.0
    %365 = vmatpush1.msra.mxu0 %v354
    %366 = vmatprep.subr.mxu0 0.0
    %367 = vmatpush1.msra.mxu0 %v355
    %368 = vmatprep.subr.mxu0 0.0
    %369 = vmatpush1.msra.mxu0 0.0
    %370 = vmatprep.subr.mxu0 0.0
    %371 = vmatpush1.msra.mxu0 0.0
    %372 = vmatprep.subr.mxu0 0.0
    %373 = vmatpush1.msra.mxu0 0.0
    %374 = vmatprep.subr.mxu0 0.0
    %375 = vmatpush1.msra.mxu0 0.0
    %376 = vmatprep.subr.mxu0 0.0
    %377 = vmatpush1.msra.mxu0 0.0
    %378 = vmatprep.subr.mxu0 0.0
    %379 = vmatpush1.msra.mxu0 0.0
    %380 = vmatprep.subr.mxu0 0.0
    %381 = vmatpush1.msra.mxu0 0.0
    %382 = vmatprep.subr.mxu0 0.0
    %383 = vmatpush1.msra.mxu0 0.0
    %384 = vmatprep.subr.mxu0 0.0
    %385 = vmatpush1.msra.mxu0 0.0
    %386 = vmatprep.subr.mxu0 0.0
    %387 = vmatpush1.msra.mxu0 0.0
    %388 = vmatprep.subr.mxu0 0.0
    %389 = vmatpush1.msra.mxu0 0.0
    %390 = vmatprep.subr.mxu0 0.0
    %391 = vmatpush1.msra.mxu0 0.0
    %392 = vmatprep.subr.mxu0 0.0
    %393 = vmatpush1.msra.mxu0 0.0
    %394 = vmatprep.subr.mxu0 0.0
    %395 = vmatpush1.msra.mxu0 0.0
    %396 = vmatprep.subr.mxu0 0.0
    %397 = vmatpush1.msra.mxu0 0.0
    %398 = vmatprep.subr.mxu0 0.0
    %399 = vmatpush1.msra.mxu0 0.0
    %400 = vmatprep.subr.mxu0 0.0
    %401 = vmatpush1.msra.mxu0 0.0
    %402 = vmatprep.subr.mxu0 0.0
    %403 = vmatpush1.msra.mxu0 0.0
    %404 = vmatprep.subr.mxu0 0.0
    %405 = vmatpush1.msra.mxu0 0.0
    %406 = vmatprep.subr.mxu0 0.0
    %407 = vmatpush1.msra.mxu0 0.0
    %408 = vmatprep.subr.mxu0 0.0
    %409 = vmatpush1.msra.mxu0 0.0
    %410 = vmatprep.subr.mxu0 0.0
    %411 = vmatpush1.msra.mxu0 0.0
    %412 = vmatprep.subr.mxu0 0.0
    %413 = vmatpush1.msra.mxu0 0.0
    %414 = vmatprep.subr.mxu0 0.0
    %415 = vmatpush1.msra.mxu0 0.0
    %416 = vmatprep.subr.mxu0 0.0
    %417 = vmatpush1.msra.mxu0 0.0
    %418 = vmatprep.subr.mxu0 0.0
    %419 = vmatpush1.msra.mxu0 0.0
    %420 = vmatprep.subr.mxu0 0.0
    %421 = vmatpush1.msra.mxu0 0.0
    %422 = vmatprep.subr.mxu0 0.0
    %423 = vmatpush1.msra.mxu0 0.0
    %424 = vmatprep.mubr.f32.mxu0 0.0
    %425 = vmatmul.mubr.f32.gmra.mrb[0].mxu0 %v358
    %v426 = vpop.f32.mrb[0].mxu0
    %v427 = vadd.f32 %v356, %v426
    %v428 = vpop.f32.mrb[0].mxu0
    %429 = vdwg.mxu0
    %vm430 = vcmp.gt.f32.partialorder %v427, 20.0
    %v431 = vmin.f32 %v427, 20.0
    %v432 = vmul.f32 %v431, 1.442695
    %v433 = vpow.pop %v432
    %v434 = vadd.f32 %v433, 1.0
    %v435 = vlog2.pop %v434
    %v436 = vmul.f32 %v435, 0.6931472
    %v437 = vmul.f32 -0.5, %v433
    %v438 = vadd.f32 %v437, 1.0
    %v439 = vmul.f32 %v438, %v433
    %v440 = vand.u32 2147483647, %v433
    %vm441 = vcmp.lt.f32.partialorder %v440, 0.0004427343
    %v442 = vsel %vm441, %v439, %v436
    %v443 = vsel %vm430, %v427, %v442
    %v444 = vadd.f32 %v443, 1e-06
    %v445 = vlaneseq
    %v446 = vshrl.u32 %v445, 7
    %v447 = vadd.s32 %v446, 8
    %v448 = vadd.s32 %v446, 16
    %v449 = vadd.s32 %v446, 24
    %v450 = vadd.s32 %v446, 32
    %vm451 = vcmp.lt.s32.totalorder %v446, 0
    %v452 = vsub.s32 0, %v446
    %v453 = vsel %vm451, %v452, %v446
    %v454 = vshrl.u32 %v453, 1
    %v455 = vand.u32 %v453, 1
    %v456 = vsub.s32 0, %v455
    %v457 = vsel %vm451, %v456, %v455
    %vm458 = vcmp.lt.s32.totalorder %v447, 0
    %v459 = vsub.s32 0, %v447
    %v460 = vsel %vm458, %v459, %v447
    %v461 = vshrl.u32 %v460, 1
    %v462 = vand.u32 %v460, 1
    %v463 = vsub.s32 0, %v462
    %v464 = vsel %vm458, %v463, %v462
    %vm465 = vcmp.lt.s32.totalorder %v448, 0
    %v466 = vsub.s32 0, %v448
    %v467 = vsel %vm465, %v466, %v448
    %v468 = vshrl.u32 %v467, 1
    %v469 = vand.u32 %v467, 1
    %v470 = vsub.s32 0, %v469
    %v471 = vsel %vm465, %v470, %v469
    %vm472 = vcmp.lt.s32.totalorder %v449, 0
    %v473 = vsub.s32 0, %v449
    %v474 = vsel %vm472, %v473, %v449
    %v475 = vshrl.u32 %v474, 1
    %v476 = vand.u32 %v474, 1
    %v477 = vsub.s32 0, %v476
    %v478 = vsel %vm472, %v477, %v476
    %vm479 = vcmp.lt.s32.totalorder %v450, 0
    %v480 = vsub.s32 0, %v450
    %v481 = vsel %vm479, %v480, %v450
    %v482 = vshrl.u32 %v481, 1
    %v483 = vand.u32 %v481, 1
    %v484 = vsub.s32 0, %v483
    %v485 = vsel %vm479, %v484, %v483
    %vm486 = vcmp.ne.s32.totalorder %v457, 0
    %vm487 = vcmp.ne.s32.totalorder %v464, 0
    %vm488 = vcmp.ne.s32.totalorder %v471, 0
    %vm489 = vcmp.ne.s32.totalorder %v478, 0
    %vm490 = vcmp.ne.s32.totalorder %v485, 0
    %vm491 = vcmp.lt.s32.totalorder %v457, 0
    %vm492 = vcmp.lt.s32.totalorder %v464, 0
    %vm493 = vcmp.lt.s32.totalorder %v471, 0
    %vm494 = vcmp.lt.s32.totalorder %v478, 0
    %vm495 = vcmp.lt.s32.totalorder %v485, 0
    %vm496 = vmand %vm491, %vm486
    %vm497 = vmand %vm492, %vm487
    %vm498 = vmand %vm493, %vm488
    %vm499 = vmand %vm494, %vm489
    %vm500 = vmand %vm495, %vm490
    %v501 = vadd.s32 %v457, 2
    %v502 = vadd.s32 %v464, 2
    %v503 = vadd.s32 %v471, 2
    %v504 = vadd.s32 %v478, 2
    %v505 = vadd.s32 %v485, 2
    %v506 = vsel %vm496, %v501, %v457
    %v507 = vsel %vm497, %v502, %v464
    %v508 = vsel %vm498, %v503, %v471
    %v509 = vsel %vm499, %v504, %v478
    %v510 = vsel %vm500, %v505, %v485
    %v511 = vlaneseq
    %v512 = vshrl.u32 %v511, 7
    %v513 = vsub.s32 0, %v512
    %v514 = vrot.slane %v187, %v513
    %vm515 = vcmp.eq.s32.totalorder %v506, 1
    %vm516 = vcmp.eq.s32.totalorder %v507, 1
    %vm517 = vcmp.eq.s32.totalorder %v508, 1
    %vm518 = vcmp.eq.s32.totalorder %v509, 1
    %vm519 = vcmp.eq.s32.totalorder %v510, 1
    %v520 = vlaneseq
    %v521 = vshrl.u32 %v520, 7
    %v522 = vsub.s32 1, %v521
    %v523 = vrot.slane %v187, %v522
    %v524 = vsel %vm515, %v523, %v514
    %v525 = vsel %vm516, %v523, %v514
    %v526 = vsel %vm517, %v523, %v514
    %v527 = vsel %vm518, %v523, %v514
    %v528 = vsel %vm519, %v523, %v514
    %s529 = scalar_lea.vmem [#allocation4], 96
    %v530 = vld [vmem:[%s529] sm:$0xff]
    %v531 = vld [vmem:[%s529 + $0x8] sm:$0xff]
    %v532 = vld [vmem:[%s529 + $0x10] sm:$0xff]
    %v533 = vld [vmem:[%s529 + $0x18] sm:$0xff]
    %v534 = vld [vmem:[%s6 + $0x4] ss:$0 sm:$0xff]
    %540 = vrot.lane.b32.xlu0 %v524, 96
    %v541 = vpop.permute.xlu0 %540
    %542 = vrot.lane.b32.xlu0 %v525, 96
    %v543 = vpop.permute.xlu0 %542
    %544 = vrot.lane.b32.xlu0 %v526, 96
    %v545 = vpop.permute.xlu0 %544
    %546 = vrot.lane.b32.xlu0 %v527, 96
    %v547 = vpop.permute.xlu0 %546
    %548 = vrot.lane.b32.xlu0 %v528, 96
    %v549 = vpop.permute.xlu0 %548
    %v550 = vsel %vm193, %v541, 0
    %v552 = vsel %vm193, %v543, 0
    %v554 = vsel %vm193, %v545, 0
    %v556 = vsel %vm193, %v547, 0
    %v558 = vsel %vm193, %v549, 0
    %560 = vmatprep.subr.mxu0 0.0
    %561 = vmatpush1.msra.mxu0 %v530
    %562 = vmatprep.subr.mxu0 0.0
    %563 = vmatpush1.msra.mxu0 %v531
    %564 = vmatprep.subr.mxu0 0.0
    %565 = vmatpush1.msra.mxu0 %v532
    %566 = vmatprep.subr.mxu0 0.0
    %567 = vmatpush1.msra.mxu0 %v533
    %568 = vmatprep.subr.mxu0 0.0
    %569 = vmatpush1.msra.mxu0 0.0
    %570 = vmatprep.subr.mxu0 0.0
    %571 = vmatpush1.msra.mxu0 0.0
    %572 = vmatprep.subr.mxu0 0.0
    %573 = vmatpush1.msra.mxu0 0.0
    %574 = vmatprep.subr.mxu0 0.0
    %575 = vmatpush1.msra.mxu0 0.0
    %576 = vmatprep.subr.mxu0 0.0
    %577 = vmatpush1.msra.mxu0 0.0
    %578 = vmatprep.subr.mxu0 0.0
    %579 = vmatpush1.msra.mxu0 0.0
    %580 = vmatprep.subr.mxu0 0.0
    %581 = vmatpush1.msra.mxu0 0.0
    %582 = vmatprep.subr.mxu0 0.0
    %583 = vmatpush1.msra.mxu0 0.0
    %584 = vmatprep.subr.mxu0 0.0
    %585 = vmatpush1.msra.mxu0 0.0
    %586 = vmatprep.subr.mxu0 0.0
    %587 = vmatpush1.msra.mxu0 0.0
    %588 = vmatprep.subr.mxu0 0.0
    %589 = vmatpush1.msra.mxu0 0.0
    %590 = vmatprep.subr.mxu0 0.0
    %591 = vmatpush1.msra.mxu0 0.0
    %592 = vmatprep.subr.mxu0 0.0
    %593 = vmatpush1.msra.mxu0 0.0
    %594 = vmatprep.subr.mxu0 0.0
    %595 = vmatpush1.msra.mxu0 0.0
    %596 = vmatprep.subr.mxu0 0.0
    %597 = vmatpush1.msra.mxu0 0.0
    %598 = vmatprep.subr.mxu0 0.0
    %599 = vmatpush1.msra.mxu0 0.0
    %600 = vmatprep.subr.mxu0 0.0
    %601 = vmatpush1.msra.mxu0 0.0
    %602 = vmatprep.subr.mxu0 0.0
    %603 = vmatpush1.msra.mxu0 0.0
    %604 = vmatprep.subr.mxu0 0.0
    %605 = vmatpush1.msra.mxu0 0.0
    %606 = vmatprep.subr.mxu0 0.0
    %607 = vmatpush1.msra.mxu0 0.0
    %608 = vmatprep.subr.mxu0 0.0
    %609 = vmatpush1.msra.mxu0 0.0
    %610 = vmatprep.subr.mxu0 0.0
    %611 = vmatpush1.msra.mxu0 0.0
    %612 = vmatprep.subr.mxu0 0.0
    %613 = vmatpush1.msra.mxu0 0.0
    %614 = vmatprep.subr.mxu0 0.0
    %615 = vmatpush1.msra.mxu0 0.0
    %616 = vmatprep.subr.mxu0 0.0
    %617 = vmatpush1.msra.mxu0 0.0
    %618 = vmatprep.subr.mxu0 0.0
    %619 = vmatpush1.msra.mxu0 0.0
    %620 = vmatprep.subr.mxu0 0.0
    %621 = vmatpush1.msra.mxu0 0.0
    %622 = vmatprep.subr.mxu0 0.0
    %623 = vmatpush1.msra.mxu0 0.0
    %624 = vmatprep.mubr.f32.mxu0 0.0
    %625 = vmatmul.mubr.f32.gmra.mrb[0].mxu0 %v550
    %v626 = vpop.f32.mrb[0].mxu0
    %v627 = vadd.f32 %v534, %v626
    %v628 = vpop.f32.mrb[0].mxu0
    %629 = vmatprep.mubr.f32.mxu0 0.0
    %630 = vmatmul.mubr.f32.gmra.mrb[0].mxu0 %v552
    %v631 = vpop.f32.mrb[0].mxu0
    %v632 = vadd.f32 %v534, %v631
    %v633 = vpop.f32.mrb[0].mxu0
    %634 = vmatprep.mubr.f32.mxu0 0.0
    %635 = vmatmul.mubr.f32.gmra.mrb[0].mxu0 %v554
    %v636 = vpop.f32.mrb[0].mxu0
    %v637 = vadd.f32 %v534, %v636
    %v638 = vpop.f32.mrb[0].mxu0
    %639 = vmatprep.mubr.f32.mxu0 0.0
    %640 = vmatmul.mubr.f32.gmra.mrb[0].mxu0 %v556
    %v641 = vpop.f32.mrb[0].mxu0
    %v642 = vadd.f32 %v534, %v641
    %v643 = vpop.f32.mrb[0].mxu0
    %644 = vmatprep.mubr.f32.mxu0 0.0
    %645 = vmatmul.mubr.f32.gmra.mrb[0].mxu0 %v558
    %v646 = vpop.f32.mrb[0].mxu0
    %v647 = vadd.f32 %v534, %v646
    %v648 = vpop.f32.mrb[0].mxu0
    %649 = vdwg.mxu0
    %vm650 = vcmp.gt.f32.partialorder %v627, 20.0
    %vm651 = vcmp.gt.f32.partialorder %v632, 20.0
    %vm652 = vcmp.gt.f32.partialorder %v637, 20.0
    %vm653 = vcmp.gt.f32.partialorder %v642, 20.0
    %vm654 = vcmp.gt.f32.partialorder %v647, 20.0
    %v655 = vmin.f32 %v627, 20.0
    %v656 = vmin.f32 %v632, 20.0
    %v657 = vmin.f32 %v637, 20.0
    %v658 = vmin.f32 %v642, 20.0
    %v659 = vmin.f32 %v647, 20.0
    %v660 = vmul.f32 %v655, 1.442695
    %v661 = vpow.pop %v660
    %v662 = vmul.f32 %v656, 1.442695
    %v663 = vpow.pop %v662
    %v664 = vmul.f32 %v657, 1.442695
    %v665 = vpow.pop %v664
    %v666 = vmul.f32 %v658, 1.442695
    %v667 = vpow.pop %v666
    %v668 = vmul.f32 %v659, 1.442695
    %v669 = vpow.pop %v668
    %v670 = vadd.f32 %v661, 1.0
    %v671 = vlog2.pop %v670
    %v672 = vmul.f32 %v671, 0.6931472
    %v673 = vmul.f32 -0.5, %v661
    %v674 = vadd.f32 %v673, 1.0
    %v675 = vmul.f32 %v674, %v661
    %v676 = vand.u32 2147483647, %v661
    %vm677 = vcmp.lt.f32.partialorder %v676, 0.0004427343
    %v678 = vsel %vm677, %v675, %v672
    %v679 = vadd.f32 %v663, 1.0
    %v680 = vlog2.pop %v679
    %v681 = vmul.f32 %v680, 0.6931472
    %v682 = vmul.f32 -0.5, %v663
    %v683 = vadd.f32 %v682, 1.0
    %v684 = vmul.f32 %v683, %v663
    %v685 = vand.u32 2147483647, %v663
    %vm686 = vcmp.lt.f32.partialorder %v685, 0.0004427343
    %v687 = vsel %vm686, %v684, %v681
    %v688 = vadd.f32 %v665, 1.0
    %v689 = vlog2.pop %v688
    %v690 = vmul.f32 %v689, 0.6931472
    %v691 = vmul.f32 -0.5, %v665
    %v692 = vadd.f32 %v691, 1.0
    %v693 = vmul.f32 %v692, %v665
    %v694 = vand.u32 2147483647, %v665
    %vm695 = vcmp.lt.f32.partialorder %v694, 0.0004427343
    %v696 = vsel %vm695, %v693, %v690
    %v697 = vadd.f32 %v667, 1.0
    %v698 = vlog2.pop %v697
    %v699 = vmul.f32 %v698, 0.6931472
    %v700 = vmul.f32 -0.5, %v667
    %v701 = vadd.f32 %v700, 1.0
    %v702 = vmul.f32 %v701, %v667
    %v703 = vand.u32 2147483647, %v667
    %vm704 = vcmp.lt.f32.partialorder %v703, 0.0004427343
    %v705 = vsel %vm704, %v702, %v699
    %v706 = vadd.f32 %v669, 1.0
    %v707 = vlog2.pop %v706
    %v708 = vmul.f32 %v707, 0.6931472
    %v709 = vmul.f32 -0.5, %v669
    %v710 = vadd.f32 %v709, 1.0
    %v711 = vmul.f32 %v710, %v669
    %v712 = vand.u32 2147483647, %v669
    %vm713 = vcmp.lt.f32.partialorder %v712, 0.0004427343
    %v714 = vsel %vm713, %v711, %v708
    %v715 = vsel %vm650, %v627, %v678
    %v716 = vsel %vm651, %v632, %v687
    %v717 = vsel %vm652, %v637, %v696
    %v718 = vsel %vm653, %v642, %v705
    %v719 = vsel %vm654, %v647, %v714
    %v720 = vadd.f32 %v715, 1e-06
    %v721 = vadd.f32 %v716, 1e-06
    %v722 = vadd.f32 %v717, 1e-06
    %v723 = vadd.f32 %v718, 1e-06
    %v724 = vadd.f32 %v719, 1e-06
    %726 = vrot.lane.b32.xlu0 %v627, 64
    %v727 = vpop.permute.xlu0 %726
    %730 = vrot.lane.b32.xlu0 %v720, 64
    %v731 = vpop.permute.xlu0 %730
    %v733 = vsel %vm193, %v427, %v444
    %vm734 = vcmask 523264
    %v735 = vsel %vm734, %v733, %v727
    %vm736 = vcmask 785408
    %v737 = vsel %vm736, %v735, %v731
    %738 = vst [vmem:[%s7] sm:$0x3] %v737
    %v739 = vld [vmem:[%s2] sm:$0xff]
    %v740 = vld [vmem:[%s2 + $0x8] sm:$0xff]
    %v741 = vld [vmem:[%s2 + $0x10] sm:$0xff]
    %v742 = vld [vmem:[%s2 + $0x18] sm:$0xff]
    %v743 = vld [vmem:[%s2 + $0x20] sm:$0xff]
    %749 = vrot.lane.b32.xlu0 %v739, 32
    %v750 = vpop.permute.xlu0 %749
    %751 = vrot.lane.b32.xlu0 %v740, 32
    %v752 = vpop.permute.xlu0 %751
    %753 = vrot.lane.b32.xlu0 %v741, 32
    %v754 = vpop.permute.xlu0 %753
    %755 = vrot.lane.b32.xlu0 %v742, 32
    %v756 = vpop.permute.xlu0 %755
    %757 = vrot.lane.b32.xlu0 %v743, 32
    %v758 = vpop.permute.xlu0 %757
    %v764 = vmul.f32 %v720, %v750
    %v765 = vmul.f32 %v721, %v752
    %v766 = vmul.f32 %v722, %v754
    %v767 = vmul.f32 %v723, %v756
    %v768 = vmul.f32 %v724, %v758
    %774 = vrot.lane.b32.xlu0 %v764, 96
    %v775 = vpop.permute.xlu0 %774
    %776 = vrot.lane.b32.xlu0 %v765, 96
    %v777 = vpop.permute.xlu0 %776
    %778 = vrot.lane.b32.xlu0 %v766, 96
    %v779 = vpop.permute.xlu0 %778
    %780 = vrot.lane.b32.xlu0 %v767, 96
    %v781 = vpop.permute.xlu0 %780
    %782 = vrot.lane.b32.xlu0 %v768, 96
    %v783 = vpop.permute.xlu0 %782
    %v789 = vadd.f32 %v627, %v775
    %v790 = vadd.f32 %v632, %v777
    %v791 = vadd.f32 %v637, %v779
    %v792 = vadd.f32 %v642, %v781
    %v793 = vadd.f32 %v647, %v783
    %s794 = scalar_lea.vmem [#allocation4], 128
    %v795 = vld [vmem:[%s794] sm:$0xff]
    %v796 = vld [vmem:[%s794 + $0x8] sm:$0xff]
    %v797 = vld [vmem:[%s794 + $0x10] sm:$0xff]
    %v798 = vld [vmem:[%s794 + $0x18] sm:$0xff]
    %v799 = vld [vmem:[%s6 + $0x5] ss:$0 sm:$0xff]
    %v801 = vsel %vm193, %v789, 0
    %v804 = vsel %vm193, %v790, 0
    %v807 = vsel %vm193, %v791, 0
    %v810 = vsel %vm193, %v792, 0
    %v813 = vsel %vm193, %v793, 0
    %815 = vmatprep.subr.mxu0 0.0
    %816 = vmatpush1.msra.mxu0 %v795
    %817 = vmatprep.subr.mxu0 0.0
    %818 = vmatpush1.msra.mxu0 %v796
    %819 = vmatprep.subr.mxu0 0.0
    %820 = vmatpush1.msra.mxu0 %v797
    %821 = vmatprep.subr.mxu0 0.0
    %822 = vmatpush1.msra.mxu0 %v798
    %823 = vmatprep.subr.mxu0 0.0
    %824 = vmatpush1.msra.mxu0 0.0
    %825 = vmatprep.subr.mxu0 0.0
    %826 = vmatpush1.msra.mxu0 0.0
    %827 = vmatprep.subr.mxu0 0.0
    %828 = vmatpush1.msra.mxu0 0.0
    %829 = vmatprep.subr.mxu0 0.0
    %830 = vmatpush1.msra.mxu0 0.0
    %831 = vmatprep.subr.mxu0 0.0
    %832 = vmatpush1.msra.mxu0 0.0
    %833 = vmatprep.subr.mxu0 0.0
    %834 = vmatpush1.msra.mxu0 0.0
    %835 = vmatprep.subr.mxu0 0.0
    %836 = vmatpush1.msra.mxu0 0.0
    %837 = vmatprep.subr.mxu0 0.0
    %838 = vmatpush1.msra.mxu0 0.0
    %839 = vmatprep.subr.mxu0 0.0
    %840 = vmatpush1.msra.mxu0 0.0
    %841 = vmatprep.subr.mxu0 0.0
    %842 = vmatpush1.msra.mxu0 0.0
    %843 = vmatprep.subr.mxu0 0.0
    %844 = vmatpush1.msra.mxu0 0.0
    %845 = vmatprep.subr.mxu0 0.0
    %846 = vmatpush1.msra.mxu0 0.0
    %847 = vmatprep.subr.mxu0 0.0
    %848 = vmatpush1.msra.mxu0 0.0
    %849 = vmatprep.subr.mxu0 0.0
    %850 = vmatpush1.msra.mxu0 0.0
    %851 = vmatprep.subr.mxu0 0.0
    %852 = vmatpush1.msra.mxu0 0.0
    %853 = vmatprep.subr.mxu0 0.0
    %854 = vmatpush1.msra.mxu0 0.0
    %855 = vmatprep.subr.mxu0 0.0
    %856 = vmatpush1.msra.mxu0 0.0
    %857 = vmatprep.subr.mxu0 0.0
    %858 = vmatpush1.msra.mxu0 0.0
    %859 = vmatprep.subr.mxu0 0.0
    %860 = vmatpush1.msra.mxu0 0.0
    %861 = vmatprep.subr.mxu0 0.0
    %862 = vmatpush1.msra.mxu0 0.0
    %863 = vmatprep.subr.mxu0 0.0
    %864 = vmatpush1.msra.mxu0 0.0
    %865 = vmatprep.subr.mxu0 0.0
    %866 = vmatpush1.msra.mxu0 0.0
    %867 = vmatprep.subr.mxu0 0.0
    %868 = vmatpush1.msra.mxu0 0.0
    %869 = vmatprep.subr.mxu0 0.0
    %870 = vmatpush1.msra.mxu0 0.0
    %871 = vmatprep.subr.mxu0 0.0
    %872 = vmatpush1.msra.mxu0 0.0
    %873 = vmatprep.subr.mxu0 0.0
    %874 = vmatpush1.msra.mxu0 0.0
    %875 = vmatprep.subr.mxu0 0.0
    %876 = vmatpush1.msra.mxu0 0.0
    %877 = vmatprep.subr.mxu0 0.0
    %878 = vmatpush1.msra.mxu0 0.0
    %879 = vmatprep.mubr.f32.mxu0 0.0
    %880 = vmatmul.mubr.f32.gmra.mrb[0].mxu0 %v801
    %v881 = vpop.f32.mrb[0].mxu0
    %v882 = vadd.f32 %v799, %v881
    %v883 = vpop.f32.mrb[0].mxu0
    %884 = vmatprep.mubr.f32.mxu0 0.0
    %885 = vmatmul.mubr.f32.gmra.mrb[0].mxu0 %v804
    %v886 = vpop.f32.mrb[0].mxu0
    %v887 = vadd.f32 %v799, %v886
    %v888 = vpop.f32.mrb[0].mxu0
    %889 = vmatprep.mubr.f32.mxu0 0.0
    %890 = vmatmul.mubr.f32.gmra.mrb[0].mxu0 %v807
    %v891 = vpop.f32.mrb[0].mxu0
    %v892 = vadd.f32 %v799, %v891
    %v893 = vpop.f32.mrb[0].mxu0
    %894 = vmatprep.mubr.f32.mxu0 0.0
    %895 = vmatmul.mubr.f32.gmra.mrb[0].mxu0 %v810
    %v896 = vpop.f32.mrb[0].mxu0
    %v897 = vadd.f32 %v799, %v896
    %v898 = vpop.f32.mrb[0].mxu0
    %899 = vmatprep.mubr.f32.mxu0 0.0
    %900 = vmatmul.mubr.f32.gmra.mrb[0].mxu0 %v813
    %v901 = vpop.f32.mrb[0].mxu0
    %v902 = vadd.f32 %v799, %v901
    %v903 = vpop.f32.mrb[0].mxu0
    %904 = vdwg.mxu0
    %v905 = vmax.f32 %v882, 0.0
    %v906 = vmax.f32 %v887, 0.0
    %v907 = vmax.f32 %v892, 0.0
    %v908 = vmax.f32 %v897, 0.0
    %v909 = vmax.f32 %v902, 0.0
    %v910 = vtanh.pop %v882
    %v911 = vtanh.pop %v887
    %v912 = vtanh.pop %v892
    %v913 = vtanh.pop %v897
    %v914 = vtanh.pop %v902
    %s915 = scalar_lea.vmem [#allocation4], 160
    %v916 = vld [vmem:[%s915] sm:$0xff]
    %v917 = vld [vmem:[%s915 + $0x8] sm:$0xff]
    %v918 = vld [vmem:[%s915 + $0x10] sm:$0xff]
    %v919 = vld [vmem:[%s915 + $0x18] sm:$0xff]
    %v921 = vsel %vm193, %v905, 0
    %v924 = vsel %vm193, %v906, 0
    %v927 = vsel %vm193, %v907, 0
    %v930 = vsel %vm193, %v908, 0
    %v933 = vsel %vm193, %v909, 0
    %935 = vmatprep.subr.mxu0 0.0
    %936 = vmatpush1.msra.mxu0 %v916
    %937 = vmatprep.subr.mxu0 0.0
    %938 = vmatpush1.msra.mxu0 %v917
    %939 = vmatprep.subr.mxu0 0.0
    %940 = vmatpush1.msra.mxu0 %v918
    %941 = vmatprep.subr.mxu0 0.0
    %942 = vmatpush1.msra.mxu0 %v919
    %943 = vmatprep.subr.mxu0 0.0
    %944 = vmatpush1.msra.mxu0 0.0
    %945 = vmatprep.subr.mxu0 0.0
    %946 = vmatpush1.msra.mxu0 0.0
    %947 = vmatprep.subr.mxu0 0.0
    %948 = vmatpush1.msra.mxu0 0.0
    %949 = vmatprep.subr.mxu0 0.0
    %950 = vmatpush1.msra.mxu0 0.0
    %951 = vmatprep.subr.mxu0 0.0
    %952 = vmatpush1.msra.mxu0 0.0
    %953 = vmatprep.subr.mxu0 0.0
    %954 = vmatpush1.msra.mxu0 0.0
    %955 = vmatprep.subr.mxu0 0.0
    %956 = vmatpush1.msra.mxu0 0.0
    %957 = vmatprep.subr.mxu0 0.0
    %958 = vmatpush1.msra.mxu0 0.0
    %959 = vmatprep.subr.mxu0 0.0
    %960 = vmatpush1.msra.mxu0 0.0
    %961 = vmatprep.subr.mxu0 0.0
    %962 = vmatpush1.msra.mxu0 0.0
    %963 = vmatprep.subr.mxu0 0.0
    %964 = vmatpush1.msra.mxu0 0.0
    %965 = vmatprep.subr.mxu0 0.0
    %966 = vmatpush1.msra.mxu0 0.0
    %967 = vmatprep.subr.mxu0 0.0
    %968 = vmatpush1.msra.mxu0 0.0
    %969 = vmatprep.subr.mxu0 0.0
    %970 = vmatpush1.msra.mxu0 0.0
    %971 = vmatprep.subr.mxu0 0.0
    %972 = vmatpush1.msra.mxu0 0.0
    %973 = vmatprep.subr.mxu0 0.0
    %974 = vmatpush1.msra.mxu0 0.0
    %975 = vmatprep.subr.mxu0 0.0
    %976 = vmatpush1.msra.mxu0 0.0
    %977 = vmatprep.subr.mxu0 0.0
    %978 = vmatpush1.msra.mxu0 0.0
    %979 = vmatprep.subr.mxu0 0.0
    %980 = vmatpush1.msra.mxu0 0.0
    %981 = vmatprep.subr.mxu0 0.0
    %982 = vmatpush1.msra.mxu0 0.0
    %983 = vmatprep.subr.mxu0 0.0
    %984 = vmatpush1.msra.mxu0 0.0
    %985 = vmatprep.subr.mxu0 0.0
    %986 = vmatpush1.msra.mxu0 0.0
    %987 = vmatprep.subr.mxu0 0.0
    %988 = vmatpush1.msra.mxu0 0.0
    %989 = vmatprep.subr.mxu0 0.0
    %990 = vmatpush1.msra.mxu0 0.0
    %991 = vmatprep.subr.mxu0 0.0
    %992 = vmatpush1.msra.mxu0 0.0
    %993 = vmatprep.subr.mxu0 0.0
    %994 = vmatpush1.msra.mxu0 0.0
    %995 = vmatprep.subr.mxu0 0.0
    %996 = vmatpush1.msra.mxu0 0.0
    %997 = vmatprep.subr.mxu0 0.0
    %998 = vmatpush1.msra.mxu0 0.0
    %999 = vmatprep.mubr.f32.mxu0 0.0
    %1000 = vmatmul.mubr.f32.gmra.mrb[0].mxu0 %v921
    %v1001 = vpop.f32.mrb[0].mxu0
    %v1002 = vadd.f32 0.0, %v1001
    %v1003 = vpop.f32.mrb[0].mxu0
    %1004 = vmatprep.mubr.f32.mxu0 0.0
    %1005 = vmatmul.mubr.f32.gmra.mrb[0].mxu0 %v924
    %v1006 = vpop.f32.mrb[0].mxu0
    %v1007 = vadd.f32 0.0, %v1006
    %v1008 = vpop.f32.mrb[0].mxu0
    %1009 = vmatprep.mubr.f32.mxu0 0.0
    %1010 = vmatmul.mubr.f32.gmra.mrb[0].mxu0 %v927
    %v1011 = vpop.f32.mrb[0].mxu0
    %v1012 = vadd.f32 0.0, %v1011
    %v1013 = vpop.f32.mrb[0].mxu0
    %1014 = vmatprep.mubr.f32.mxu0 0.0
    %1015 = vmatmul.mubr.f32.gmra.mrb[0].mxu0 %v930
    %v1016 = vpop.f32.mrb[0].mxu0
    %v1017 = vadd.f32 0.0, %v1016
    %v1018 = vpop.f32.mrb[0].mxu0
    %1019 = vmatprep.mubr.f32.mxu0 0.0
    %1020 = vmatmul.mubr.f32.gmra.mrb[0].mxu0 %v933
    %v1021 = vpop.f32.mrb[0].mxu0
    %v1022 = vadd.f32 0.0, %v1021
    %v1023 = vpop.f32.mrb[0].mxu0
    %1024 = vdwg.mxu0
    %v1025 = vld [vmem:[%s6 + $0x6] ss:$0 sm:$0xff]
    %v1026 = vadd.f32 %v1002, %v1025
    %v1027 = vadd.f32 %v1007, %v1025
    %v1028 = vadd.f32 %v1012, %v1025
    %v1029 = vadd.f32 %v1017, %v1025
    %v1030 = vadd.f32 %v1022, %v1025
    %v1031 = vmax.f32 %v1026, 0.0
    %v1032 = vmax.f32 %v1027, 0.0
    %v1033 = vmax.f32 %v1028, 0.0
    %v1034 = vmax.f32 %v1029, 0.0
    %v1035 = vmax.f32 %v1030, 0.0
    %s1036 = scalar_lea.vmem [#allocation4], 192
    %v1037 = vld [vmem:[%s1036] sm:$0xff]
    %v1038 = vld [vmem:[%s1036 + $0x8] sm:$0xff]
    %v1039 = vld [vmem:[%s1036 + $0x10] sm:$0xff]
    %v1040 = vld [vmem:[%s1036 + $0x18] sm:$0xff]
    %v1041 = vld [vmem:[%s6 + $0x7] ss:$0 sm:$0xff]
    %v1043 = vsel %vm193, %v1031, 0
    %v1046 = vsel %vm193, %v1032, 0
    %v1049 = vsel %vm193, %v1033, 0
    %v1052 = vsel %vm193, %v1034, 0
    %v1055 = vsel %vm193, %v1035, 0
    %1057 = vmatprep.subr.mxu0 0.0
    %1058 = vmatpush1.msra.mxu0 %v1037
    %1059 = vmatprep.subr.mxu0 0.0
    %1060 = vmatpush1.msra.mxu0 %v1038
    %1061 = vmatprep.subr.mxu0 0.0
    %1062 = vmatpush1.msra.mxu0 %v1039
    %1063 = vmatprep.subr.mxu0 0.0
    %1064 = vmatpush1.msra.mxu0 %v1040
    %1065 = vmatprep.subr.mxu0 0.0
    %1066 = vmatpush1.msra.mxu0 0.0
    %1067 = vmatprep.subr.mxu0 0.0
    %1068 = vmatpush1.msra.mxu0 0.0
    %1069 = vmatprep.subr.mxu0 0.0
    %1070 = vmatpush1.msra.mxu0 0.0
    %1071 = vmatprep.subr.mxu0 0.0
    %1072 = vmatpush1.msra.mxu0 0.0
    %1073 = vmatprep.subr.mxu0 0.0
    %1074 = vmatpush1.msra.mxu0 0.0
    %1075 = vmatprep.subr.mxu0 0.0
    %1076 = vmatpush1.msra.mxu0 0.0
    %1077 = vmatprep.subr.mxu0 0.0
    %1078 = vmatpush1.msra.mxu0 0.0
    %1079 = vmatprep.subr.mxu0 0.0
    %1080 = vmatpush1.msra.mxu0 0.0
    %1081 = vmatprep.subr.mxu0 0.0
    %1082 = vmatpush1.msra.mxu0 0.0
    %1083 = vmatprep.subr.mxu0 0.0
    %1084 = vmatpush1.msra.mxu0 0.0
    %1085 = vmatprep.subr.mxu0 0.0
    %1086 = vmatpush1.msra.mxu0 0.0
    %1087 = vmatprep.subr.mxu0 0.0
    %1088 = vmatpush1.msra.mxu0 0.0
    %1089 = vmatprep.subr.mxu0 0.0
    %1090 = vmatpush1.msra.mxu0 0.0
    %1091 = vmatprep.subr.mxu0 0.0
    %1092 = vmatpush1.msra.mxu0 0.0
    %1093 = vmatprep.subr.mxu0 0.0
    %1094 = vmatpush1.msra.mxu0 0.0
    %1095 = vmatprep.subr.mxu0 0.0
    %1096 = vmatpush1.msra.mxu0 0.0
    %1097 = vmatprep.subr.mxu0 0.0
    %1098 = vmatpush1.msra.mxu0 0.0
    %1099 = vmatprep.subr.mxu0 0.0
    %1100 = vmatpush1.msra.mxu0 0.0
    %1101 = vmatprep.subr.mxu0 0.0
    %1102 = vmatpush1.msra.mxu0 0.0
    %1103 = vmatprep.subr.mxu0 0.0
    %1104 = vmatpush1.msra.mxu0 0.0
    %1105 = vmatprep.subr.mxu0 0.0
    %1106 = vmatpush1.msra.mxu0 0.0
    %1107 = vmatprep.subr.mxu0 0.0
    %1108 = vmatpush1.msra.mxu0 0.0
    %1109 = vmatprep.subr.mxu0 0.0
    %1110 = vmatpush1.msra.mxu0 0.0
    %1111 = vmatprep.subr.mxu0 0.0
    %1112 = vmatpush1.msra.mxu0 0.0
    %1113 = vmatprep.subr.mxu0 0.0
    %1114 = vmatpush1.msra.mxu0 0.0
    %1115 = vmatprep.subr.mxu0 0.0
    %1116 = vmatpush1.msra.mxu0 0.0
    %1117 = vmatprep.subr.mxu0 0.0
    %1118 = vmatpush1.msra.mxu0 0.0
    %1119 = vmatprep.subr.mxu0 0.0
    %1120 = vmatpush1.msra.mxu0 0.0
    %1121 = vmatprep.mubr.f32.mxu0 0.0
    %1122 = vmatmul.mubr.f32.gmra.mrb[0].mxu0 %v1043
    %v1123 = vpop.f32.mrb[0].mxu0
    %v1124 = vadd.f32 %v1041, %v1123
    %v1125 = vpop.f32.mrb[0].mxu0
    %1126 = vmatprep.mubr.f32.mxu0 0.0
    %1127 = vmatmul.mubr.f32.gmra.mrb[0].mxu0 %v1046
    %v1128 = vpop.f32.mrb[0].mxu0
    %v1129 = vadd.f32 %v1041, %v1128
    %v1130 = vpop.f32.mrb[0].mxu0
    %1131 = vmatprep.mubr.f32.mxu0 0.0
    %1132 = vmatmul.mubr.f32.gmra.mrb[0].mxu0 %v1049
    %v1133 = vpop.f32.mrb[0].mxu0
    %v1134 = vadd.f32 %v1041, %v1133
    %v1135 = vpop.f32.mrb[0].mxu0
    %1136 = vmatprep.mubr.f32.mxu0 0.0
    %1137 = vmatmul.mubr.f32.gmra.mrb[0].mxu0 %v1052
    %v1138 = vpop.f32.mrb[0].mxu0
    %v1139 = vadd.f32 %v1041, %v1138
    %v1140 = vpop.f32.mrb[0].mxu0
    %1141 = vmatprep.mubr.f32.mxu0 0.0
    %1142 = vmatmul.mubr.f32.gmra.mrb[0].mxu0 %v1055
    %v1143 = vpop.f32.mrb[0].mxu0
    %v1144 = vadd.f32 %v1041, %v1143
    %v1145 = vpop.f32.mrb[0].mxu0
    %1146 = vdwg.mxu0
    %vm1147 = vcmp.gt.f32.partialorder %v1124, 20.0
    %vm1148 = vcmp.gt.f32.partialorder %v1129, 20.0
    %vm1149 = vcmp.gt.f32.partialorder %v1134, 20.0
    %vm1150 = vcmp.gt.f32.partialorder %v1139, 20.0
    %vm1151 = vcmp.gt.f32.partialorder %v1144, 20.0
    %v1152 = vmin.f32 %v1124, 20.0
    %v1153 = vmin.f32 %v1129, 20.0
    %v1154 = vmin.f32 %v1134, 20.0
    %v1155 = vmin.f32 %v1139, 20.0
    %v1156 = vmin.f32 %v1144, 20.0
    %v1157 = vmul.f32 %v1152, 1.442695
    %v1158 = vpow.pop %v1157
    %v1159 = vmul.f32 %v1153, 1.442695
    %v1160 = vpow.pop %v1159
    %v1161 = vmul.f32 %v1154, 1.442695
    %v1162 = vpow.pop %v1161
    %v1163 = vmul.f32 %v1155, 1.442695
    %v1164 = vpow.pop %v1163
    %v1165 = vmul.f32 %v1156, 1.442695
    %v1166 = vpow.pop %v1165
    %v1167 = vadd.f32 %v1158, 1.0
    %v1168 = vlog2.pop %v1167
    %v1169 = vmul.f32 %v1168, 0.6931472
    %v1170 = vmul.f32 -0.5, %v1158
    %v1171 = vadd.f32 %v1170, 1.0
    %v1172 = vmul.f32 %v1171, %v1158
    %v1173 = vand.u32 2147483647, %v1158
    %vm1174 = vcmp.lt.f32.partialorder %v1173, 0.0004427343
    %v1175 = vsel %vm1174, %v1172, %v1169
    %v1176 = vadd.f32 %v1160, 1.0
    %v1177 = vlog2.pop %v1176
    %v1178 = vmul.f32 %v1177, 0.6931472
    %v1179 = vmul.f32 -0.5, %v1160
    %v1180 = vadd.f32 %v1179, 1.0
    %v1181 = vmul.f32 %v1180, %v1160
    %v1182 = vand.u32 2147483647, %v1160
    %vm1183 = vcmp.lt.f32.partialorder %v1182, 0.0004427343
    %v1184 = vsel %vm1183, %v1181, %v1178
    %v1185 = vadd.f32 %v1162, 1.0
    %v1186 = vlog2.pop %v1185
    %v1187 = vmul.f32 %v1186, 0.6931472
    %v1188 = vmul.f32 -0.5, %v1162
    %v1189 = vadd.f32 %v1188, 1.0
    %v1190 = vmul.f32 %v1189, %v1162
    %v1191 = vand.u32 2147483647, %v1162
    %vm1192 = vcmp.lt.f32.partialorder %v1191, 0.0004427343
    %v1193 = vsel %vm1192, %v1190, %v1187
    %v1194 = vadd.f32 %v1164, 1.0
    %v1195 = vlog2.pop %v1194
    %v1196 = vmul.f32 %v1195, 0.6931472
    %v1197 = vmul.f32 -0.5, %v1164
    %v1198 = vadd.f32 %v1197, 1.0
    %v1199 = vmul.f32 %v1198, %v1164
    %v1200 = vand.u32 2147483647, %v1164
    %vm1201 = vcmp.lt.f32.partialorder %v1200, 0.0004427343
    %v1202 = vsel %vm1201, %v1199, %v1196
    %v1203 = vadd.f32 %v1166, 1.0
    %v1204 = vlog2.pop %v1203
    %v1205 = vmul.f32 %v1204, 0.6931472
    %v1206 = vmul.f32 -0.5, %v1166
    %v1207 = vadd.f32 %v1206, 1.0
    %v1208 = vmul.f32 %v1207, %v1166
    %v1209 = vand.u32 2147483647, %v1166
    %vm1210 = vcmp.lt.f32.partialorder %v1209, 0.0004427343
    %v1211 = vsel %vm1210, %v1208, %v1205
    %v1212 = vsel %vm1147, %v1124, %v1175
    %v1213 = vsel %vm1148, %v1129, %v1184
    %v1214 = vsel %vm1149, %v1134, %v1193
    %v1215 = vsel %vm1150, %v1139, %v1202
    %v1216 = vsel %vm1151, %v1144, %v1211
    %v1217 = vadd.f32 %v1212, 1e-06
    %v1218 = vadd.f32 %v1213, 1e-06
    %v1219 = vadd.f32 %v1214, 1e-06
    %v1220 = vadd.f32 %v1215, 1e-06
    %v1221 = vadd.f32 %v1216, 1e-06
    %s1222 = scalar_lea.vmem [#allocation4], 224
    %v1223 = vld [vmem:[%s1222] sm:$0xff]
    %v1224 = vld [vmem:[%s1222 + $0x8] sm:$0xff]
    %v1225 = vld [vmem:[%s1222 + $0x10] sm:$0xff]
    %v1226 = vld [vmem:[%s1222 + $0x18] sm:$0xff]
    %v1227 = vld [vmem:[%s6 + $0x10] ss:$0 sm:$0xff]
    %1233 = vrot.lane.b32.xlu0 %v910, 96
    %v1234 = vpop.permute.xlu0 %1233
    %1235 = vrot.lane.b32.xlu0 %v911, 96
    %v1236 = vpop.permute.xlu0 %1235
    %1237 = vrot.lane.b32.xlu0 %v912, 96
    %v1238 = vpop.permute.xlu0 %1237
    %1239 = vrot.lane.b32.xlu0 %v913, 96
    %v1240 = vpop.permute.xlu0 %1239
    %1241 = vrot.lane.b32.xlu0 %v914, 96
    %v1242 = vpop.permute.xlu0 %1241
    %v1243 = vsel %vm193, %v1234, 0
    %v1245 = vsel %vm193, %v1236, 0
    %v1247 = vsel %vm193, %v1238, 0
    %v1249 = vsel %vm193, %v1240, 0
    %v1251 = vsel %vm193, %v1242, 0
    %1253 = vmatprep.subr.mxu0 0.0
    %1254 = vmatpush1.msra.mxu0 %v1223
    %1255 = vmatprep.subr.mxu0 0.0
    %1256 = vmatpush1.msra.mxu0 %v1224
    %1257 = vmatprep.subr.mxu0 0.0
    %1258 = vmatpush1.msra.mxu0 %v1225
    %1259 = vmatprep.subr.mxu0 0.0
    %1260 = vmatpush1.msra.mxu0 %v1226
    %1261 = vmatprep.subr.mxu0 0.0
    %1262 = vmatpush1.msra.mxu0 0.0
    %1263 = vmatprep.subr.mxu0 0.0
    %1264 = vmatpush1.msra.mxu0 0.0
    %1265 = vmatprep.subr.mxu0 0.0
    %1266 = vmatpush1.msra.mxu0 0.0
    %1267 = vmatprep.subr.mxu0 0.0
    %1268 = vmatpush1.msra.mxu0 0.0
    %1269 = vmatprep.subr.mxu0 0.0
    %1270 = vmatpush1.msra.mxu0 0.0
    %1271 = vmatprep.subr.mxu0 0.0
    %1272 = vmatpush1.msra.mxu0 0.0
    %1273 = vmatprep.subr.mxu0 0.0
    %1274 = vmatpush1.msra.mxu0 0.0
    %1275 = vmatprep.subr.mxu0 0.0
    %1276 = vmatpush1.msra.mxu0 0.0
    %1277 = vmatprep.subr.mxu0 0.0
    %1278 = vmatpush1.msra.mxu0 0.0
    %1279 = vmatprep.subr.mxu0 0.0
    %1280 = vmatpush1.msra.mxu0 0.0
    %1281 = vmatprep.subr.mxu0 0.0
    %1282 = vmatpush1.msra.mxu0 0.0
    %1283 = vmatprep.subr.mxu0 0.0
    %1284 = vmatpush1.msra.mxu0 0.0
    %1285 = vmatprep.subr.mxu0 0.0
    %1286 = vmatpush1.msra.mxu0 0.0
    %1287 = vmatprep.subr.mxu0 0.0
    %1288 = vmatpush1.msra.mxu0 0.0
    %1289 = vmatprep.subr.mxu0 0.0
    %1290 = vmatpush1.msra.mxu0 0.0
    %1291 = vmatprep.subr.mxu0 0.0
    %1292 = vmatpush1.msra.mxu0 0.0
    %1293 = vmatprep.subr.mxu0 0.0
    %1294 = vmatpush1.msra.mxu0 0.0
    %1295 = vmatprep.subr.mxu0 0.0
    %1296 = vmatpush1.msra.mxu0 0.0
    %1297 = vmatprep.subr.mxu0 0.0
    %1298 = vmatpush1.msra.mxu0 0.0
    %1299 = vmatprep.subr.mxu0 0.0
    %1300 = vmatpush1.msra.mxu0 0.0
    %1301 = vmatprep.subr.mxu0 0.0
    %1302 = vmatpush1.msra.mxu0 0.0
    %1303 = vmatprep.subr.mxu0 0.0
    %1304 = vmatpush1.msra.mxu0 0.0
    %1305 = vmatprep.subr.mxu0 0.0
    %1306 = vmatpush1.msra.mxu0 0.0
    %1307 = vmatprep.subr.mxu0 0.0
    %1308 = vmatpush1.msra.mxu0 0.0
    %1309 = vmatprep.subr.mxu0 0.0
    %1310 = vmatpush1.msra.mxu0 0.0
    %1311 = vmatprep.subr.mxu0 0.0
    %1312 = vmatpush1.msra.mxu0 0.0
    %1313 = vmatprep.subr.mxu0 0.0
    %1314 = vmatpush1.msra.mxu0 0.0
    %1315 = vmatprep.subr.mxu0 0.0
    %1316 = vmatpush1.msra.mxu0 0.0
    %1317 = vmatprep.mubr.f32.mxu0 0.0
    %1318 = vmatmul.mubr.f32.gmra.mrb[0].mxu0 %v1243
    %v1319 = vpop.f32.mrb[0].mxu0
    %v1320 = vadd.f32 %v1227, %v1319
    %v1321 = vpop.f32.mrb[0].mxu0
    %1322 = vmatprep.mubr.f32.mxu0 0.0
    %1323 = vmatmul.mubr.f32.gmra.mrb[0].mxu0 %v1245
    %v1324 = vpop.f32.mrb[0].mxu0
    %v1325 = vadd.f32 %v1227, %v1324
    %v1326 = vpop.f32.mrb[0].mxu0
    %1327 = vmatprep.mubr.f32.mxu0 0.0
    %1328 = vmatmul.mubr.f32.gmra.mrb[0].mxu0 %v1247
    %v1329 = vpop.f32.mrb[0].mxu0
    %v1330 = vadd.f32 %v1227, %v1329
    %v1331 = vpop.f32.mrb[0].mxu0
    %1332 = vmatprep.mubr.f32.mxu0 0.0
    %1333 = vmatmul.mubr.f32.gmra.mrb[0].mxu0 %v1249
    %v1334 = vpop.f32.mrb[0].mxu0
    %v1335 = vadd.f32 %v1227, %v1334
    %v1336 = vpop.f32.mrb[0].mxu0
    %1337 = vmatprep.mubr.f32.mxu0 0.0
    %1338 = vmatmul.mubr.f32.gmra.mrb[0].mxu0 %v1251
    %v1339 = vpop.f32.mrb[0].mxu0
    %v1340 = vadd.f32 %v1227, %v1339
    %v1341 = vpop.f32.mrb[0].mxu0
    %1342 = vdwg.mxu0
    %vm1343 = vcmp.gt.f32.partialorder %v1320, 20.0
    %vm1344 = vcmp.gt.f32.partialorder %v1325, 20.0
    %vm1345 = vcmp.gt.f32.partialorder %v1330, 20.0
    %vm1346 = vcmp.gt.f32.partialorder %v1335, 20.0
    %vm1347 = vcmp.gt.f32.partialorder %v1340, 20.0
    %v1348 = vmin.f32 %v1320, 20.0
    %v1349 = vmin.f32 %v1325, 20.0
    %v1350 = vmin.f32 %v1330, 20.0
    %v1351 = vmin.f32 %v1335, 20.0
    %v1352 = vmin.f32 %v1340, 20.0
    %v1353 = vmul.f32 %v1348, 1.442695
    %v1354 = vpow.pop %v1353
    %v1355 = vmul.f32 %v1349, 1.442695
    %v1356 = vpow.pop %v1355
    %v1357 = vmul.f32 %v1350, 1.442695
    %v1358 = vpow.pop %v1357
    %v1359 = vmul.f32 %v1351, 1.442695
    %v1360 = vpow.pop %v1359
    %v1361 = vmul.f32 %v1352, 1.442695
    %v1362 = vpow.pop %v1361
    %v1363 = vadd.f32 %v1354, 1.0
    %v1364 = vlog2.pop %v1363
    %v1365 = vmul.f32 %v1364, 0.6931472
    %v1366 = vmul.f32 -0.5, %v1354
    %v1367 = vadd.f32 %v1366, 1.0
    %v1368 = vmul.f32 %v1367, %v1354
    %v1369 = vand.u32 2147483647, %v1354
    %vm1370 = vcmp.lt.f32.partialorder %v1369, 0.0004427343
    %v1371 = vsel %vm1370, %v1368, %v1365
    %v1372 = vadd.f32 %v1356, 1.0
    %v1373 = vlog2.pop %v1372
    %v1374 = vmul.f32 %v1373, 0.6931472
    %v1375 = vmul.f32 -0.5, %v1356
    %v1376 = vadd.f32 %v1375, 1.0
    %v1377 = vmul.f32 %v1376, %v1356
    %v1378 = vand.u32 2147483647, %v1356
    %vm1379 = vcmp.lt.f32.partialorder %v1378, 0.0004427343
    %v1380 = vsel %vm1379, %v1377, %v1374
    %v1381 = vadd.f32 %v1358, 1.0
    %v1382 = vlog2.pop %v1381
    %v1383 = vmul.f32 %v1382, 0.6931472
    %v1384 = vmul.f32 -0.5, %v1358
    %v1385 = vadd.f32 %v1384, 1.0
    %v1386 = vmul.f32 %v1385, %v1358
    %v1387 = vand.u32 2147483647, %v1358
    %vm1388 = vcmp.lt.f32.partialorder %v1387, 0.0004427343
    %v1389 = vsel %vm1388, %v1386, %v1383
    %v1390 = vadd.f32 %v1360, 1.0
    %v1391 = vlog2.pop %v1390
    %v1392 = vmul.f32 %v1391, 0.6931472
    %v1393 = vmul.f32 -0.5, %v1360
    %v1394 = vadd.f32 %v1393, 1.0
    %v1395 = vmul.f32 %v1394, %v1360
    %v1396 = vand.u32 2147483647, %v1360
    %vm1397 = vcmp.lt.f32.partialorder %v1396, 0.0004427343
    %v1398 = vsel %vm1397, %v1395, %v1392
    %v1399 = vadd.f32 %v1362, 1.0
    %v1400 = vlog2.pop %v1399
    %v1401 = vmul.f32 %v1400, 0.6931472
    %v1402 = vmul.f32 -0.5, %v1362
    %v1403 = vadd.f32 %v1402, 1.0
    %v1404 = vmul.f32 %v1403, %v1362
    %v1405 = vand.u32 2147483647, %v1362
    %vm1406 = vcmp.lt.f32.partialorder %v1405, 0.0004427343
    %v1407 = vsel %vm1406, %v1404, %v1401
    %v1408 = vsel %vm1343, %v1320, %v1371
    %v1409 = vsel %vm1344, %v1325, %v1380
    %v1410 = vsel %vm1345, %v1330, %v1389
    %v1411 = vsel %vm1346, %v1335, %v1398
    %v1412 = vsel %vm1347, %v1340, %v1407
    %v1413 = vadd.f32 %v1408, 1e-06
    %v1414 = vadd.f32 %v1409, 1e-06
    %v1415 = vadd.f32 %v1410, 1e-06
    %v1416 = vadd.f32 %v1411, 1e-06
    %v1417 = vadd.f32 %v1412, 1e-06
    %v1418 = vld [vmem:[%s3] sm:$0xff]
    %v1419 = vld [vmem:[%s3 + $0x8] sm:$0xff]
    %v1420 = vld [vmem:[%s3 + $0x10] sm:$0xff]
    %v1421 = vld [vmem:[%s3 + $0x18] sm:$0xff]
    %v1422 = vld [vmem:[%s3 + $0x20] sm:$0xff]
    %1428 = vrot.lane.b32.xlu0 %v1418, 8
    %v1429 = vpop.permute.xlu0 %1428
    %1430 = vrot.lane.b32.xlu0 %v1419, 8
    %v1431 = vpop.permute.xlu0 %1430
    %1432 = vrot.lane.b32.xlu0 %v1420, 8
    %v1433 = vpop.permute.xlu0 %1432
    %1434 = vrot.lane.b32.xlu0 %v1421, 8
    %v1435 = vpop.permute.xlu0 %1434
    %1436 = vrot.lane.b32.xlu0 %v1422, 8
    %v1437 = vpop.permute.xlu0 %1436
    %v1443 = vmul.f32 %v1413, %v1429
    %v1444 = vmul.f32 %v1414, %v1431
    %v1445 = vmul.f32 %v1415, %v1433
    %v1446 = vmul.f32 %v1416, %v1435
    %v1447 = vmul.f32 %v1417, %v1437
    %1453 = vrot.lane.b32.xlu0 %v1443, 120
    %v1454 = vpop.permute.xlu0 %1453
    %1455 = vrot.lane.b32.xlu0 %v1444, 120
    %v1456 = vpop.permute.xlu0 %1455
    %1457 = vrot.lane.b32.xlu0 %v1445, 120
    %v1458 = vpop.permute.xlu0 %1457
    %1459 = vrot.lane.b32.xlu0 %v1446, 120
    %v1460 = vpop.permute.xlu0 %1459
    %1461 = vrot.lane.b32.xlu0 %v1447, 120
    %v1462 = vpop.permute.xlu0 %1461
    %v1468 = vadd.f32 %v1320, %v1454
    %v1469 = vadd.f32 %v1325, %v1456
    %v1470 = vadd.f32 %v1330, %v1458
    %v1471 = vadd.f32 %v1335, %v1460
    %v1472 = vadd.f32 %v1340, %v1462
    %1478 = vrot.lane.b32.xlu0 %v1124, 32
    %v1479 = vpop.permute.xlu0 %1478
    %1480 = vrot.lane.b32.xlu0 %v1129, 32
    %v1481 = vpop.permute.xlu0 %1480
    %1482 = vrot.lane.b32.xlu0 %v1134, 32
    %v1483 = vpop.permute.xlu0 %1482
    %1484 = vrot.lane.b32.xlu0 %v1139, 32
    %v1485 = vpop.permute.xlu0 %1484
    %1486 = vrot.lane.b32.xlu0 %v1144, 32
    %v1487 = vpop.permute.xlu0 %1486
    %1498 = vrot.lane.b32.xlu0 %v1217, 32
    %v1499 = vpop.permute.xlu0 %1498
    %1500 = vrot.lane.b32.xlu0 %v1218, 32
    %v1501 = vpop.permute.xlu0 %1500
    %1502 = vrot.lane.b32.xlu0 %v1219, 32
    %v1503 = vpop.permute.xlu0 %1502
    %1504 = vrot.lane.b32.xlu0 %v1220, 32
    %v1505 = vpop.permute.xlu0 %1504
    %1506 = vrot.lane.b32.xlu0 %v1221, 32
    %v1507 = vpop.permute.xlu0 %1506
    %1513 = vrot.lane.b32.xlu0 %v1217, 40
    %v1514 = vpop.permute.xlu0 %1513
    %1515 = vrot.lane.b32.xlu0 %v1218, 40
    %v1516 = vpop.permute.xlu0 %1515
    %1517 = vrot.lane.b32.xlu0 %v1219, 40
    %v1518 = vpop.permute.xlu0 %1517
    %1519 = vrot.lane.b32.xlu0 %v1220, 40
    %v1520 = vpop.permute.xlu0 %1519
    %1521 = vrot.lane.b32.xlu0 %v1221, 40
    %v1522 = vpop.permute.xlu0 %1521
    %1533 = vrot.lane.b32.xlu0 %v1468, 80
    %v1534 = vpop.permute.xlu0 %1533
    %1535 = vrot.lane.b32.xlu0 %v1469, 80
    %v1536 = vpop.permute.xlu0 %1535
    %1537 = vrot.lane.b32.xlu0 %v1470, 80
    %v1538 = vpop.permute.xlu0 %1537
    %1539 = vrot.lane.b32.xlu0 %v1471, 80
    %v1540 = vpop.permute.xlu0 %1539
    %1541 = vrot.lane.b32.xlu0 %v1472, 80
    %v1542 = vpop.permute.xlu0 %1541
    %v1548 = vsel %vm193, %v789, %v1479
    %v1549 = vsel %vm193, %v790, %v1481
    %v1550 = vsel %vm193, %v791, %v1483
    %v1551 = vsel %vm193, %v792, %v1485
    %v1552 = vsel %vm193, %v793, %v1487
    %vm1553 = vcmask 392192
    %v1554 = vsel %vm1553, %v1548, %v1499
    %v1555 = vsel %vm1553, %v1549, %v1501
    %v1556 = vsel %vm1553, %v1550, %v1503
    %v1557 = vsel %vm1553, %v1551, %v1505
    %v1558 = vsel %vm1553, %v1552, %v1507
    %v1559 = vsel %vm734, %v1554, %v1479
    %v1560 = vsel %vm734, %v1555, %v1481
    %v1561 = vsel %vm734, %v1556, %v1483
    %v1562 = vsel %vm734, %v1557, %v1485
    %v1563 = vsel %vm734, %v1558, %v1487
    %vm1564 = vcmask 588800
    %v1565 = vsel %vm1564, %v1559, %v1514
    %v1566 = vsel %vm1564, %v1560, %v1516
    %v1567 = vsel %vm1564, %v1561, %v1518
    %v1568 = vsel %vm1564, %v1562, %v1520
    %v1569 = vsel %vm1564, %v1563, %v1522
    %vm1570 = vcmask 654336
    %v1571 = vsel %vm1570, %v1565, %v1534
    %v1572 = vsel %vm1570, %v1566, %v1536
    %v1573 = vsel %vm1570, %v1567, %v1538
    %v1574 = vsel %vm1570, %v1568, %v1540
    %v1575 = vsel %vm1570, %v1569, %v1542
    %vm1576 = vcmask 719872
    %v1577 = vsel %vm1576, %v1571, 0.0
    %v1578 = vsel %vm1576, %v1572, 0.0
    %v1579 = vsel %vm1576, %v1573, 0.0
    %v1580 = vsel %vm1576, %v1574, 0.0
    %v1581 = vsel %vm1576, %v1575, 0.0
    %1582 = vst [vmem:[%s8] sm:$0xff] %v1577
    %1583 = vst [vmem:[%s8 + $0x8] sm:$0xff] %v1578
    %1584 = vst [vmem:[%s8 + $0x10] sm:$0xff] %v1579
    %1585 = vst [vmem:[%s8 + $0x18] sm:$0xff] %v1580
    %1586 = vst [vmem:[%s8 + $0x20] sm:$0xff] %v1581
    // Predicated region
    $region38: #{apl_forward.1} parent=1 // pred_check
      _
    $region39: #{apl_forward.1} parent=1 // pred_check_branch
      %1588 = sbr.rel (0) target = $region41
    $region40: #{apl_forward.1} parent=1 // pred_region
      _
    $region41: #{apl_forward.1} parent=1 // pred_fallthru
      _
    // Predicated region
    $region42: #{apl_forward.1} parent=1 // pred_check
      _
    $region43: #{apl_forward.1} parent=1 // pred_check_branch
      %1590 = sbr.rel (0) target = $region45
    $region44: #{apl_forward.1} parent=1 // pred_region
      _
    $region45: #{apl_forward.1} parent=1 // pred_fallthru
      _
    // Predicated region
    $region46: #{apl_forward.1} parent=1 // pred_check
      _
    $region47: #{apl_forward.1} parent=1 // pred_check_branch
      %1592 = sbr.rel (0) target = $region49
    $region48: #{apl_forward.1} parent=1 // pred_region
      _
    $region49: #{apl_forward.1} parent=1 // pred_fallthru
      _
    // Predicated region
    $region50: #{apl_forward.1} parent=1 // pred_check
      _
    $region51: #{apl_forward.1} parent=1 // pred_check_branch
      %1594 = sbr.rel (0) target = $region53
    $region52: #{apl_forward.1} parent=1 // pred_region
      _
    $region53: #{apl_forward.1} parent=1 // pred_fallthru
      _
    %1595 = vsyncpa [#allocation3], 1
    %1596 = vsyncpa [#allocation5], 1

</llo_original>
